<compile_context>
chip_gen: v6e
topology: v6e:2x2x1
jax: 0.10.0
libtpu: 0.0.40
codegen_flags: <defaults>
</compile_context>

<pallas_src>
import functools
import math

import jax
import jax.numpy as jnp
import numpy as np
from jax.experimental import pallas as pl
from jax.experimental.pallas import tpu as pltpu

# ----------------------------- model dims -----------------------------------
IMG_C, IMG_H, IMG_W = 3, 16, 16          # conditioning image (rgb / infrared)
IMG_FLAT = IMG_C * IMG_H * IMG_W         # 768
COND_DIM = 128                           # learned-conditioning embedding dim
LAT_C, LAT_H, LAT_W = 4, 8, 8            # diffusion latent (NCHW)
Z_DIM = LAT_C * LAT_H * LAT_W            # 256
HIDDEN = 256                             # eps-model hidden width
T_DIM = 128                              # sinusoidal time-embedding dim
DDIM_STEPS = 5                           # `steps` argument of Inferen
DIFFUSION_T = 1000                       # training timesteps for the schedule


# ----------------------- host-side DDIM schedule (numpy) --------------------
def _ddim_schedule(steps):
    """Folded per-step DDIM coefficients (Python floats, baked into the kernel)
    and the padded timestep-embedding table, in sampling order (t descending).

      z_new = c_z * z + c_eps * eps + c_noise * noise
      c_z     = sqrt(a_prev) / sqrt(a_t)
      c_eps   = sqrt(1 - a_prev - sigma^2) - c_z * sqrt(1 - a_t)
      c_noise = sigma          (eta = 1.0; vanishes on the final step)
    """
    betas = np.linspace(1e-4, 2e-2, DIFFUSION_T, dtype=np.float64)
    acp = np.cumprod(1.0 - betas)
    gap = DIFFUSION_T // steps
    ts = [i * gap + 1 for i in range(steps)]
    eta = 1.0

    rows = max(8, -(-steps // 8) * 8)            # pad table rows to mult. of 8
    temb = np.zeros((rows, T_DIM), np.float32)
    half = T_DIM // 2
    freqs = np.exp(-math.log(10000.0) * np.arange(half, dtype=np.float64) / half)

    coeffs = []
    for j, i in enumerate(reversed(range(steps))):   # j = sampling step index
        t = ts[i]
        a_t = float(acp[t])
        a_prev = float(acp[ts[i - 1]]) if i > 0 else 1.0
        sigma = eta * math.sqrt((1.0 - a_prev) / (1.0 - a_t)) \
                    * math.sqrt(1.0 - a_t / a_prev)
        dir_coef = math.sqrt(max(1.0 - a_prev - sigma * sigma, 0.0))
        c_z = math.sqrt(a_prev) / math.sqrt(a_t)
        c_eps = dir_coef - c_z * math.sqrt(1.0 - a_t)
        coeffs.append((c_z, c_eps, sigma))
        ang = t * freqs
        temb[j, :half] = np.sin(ang)
        temb[j, half:] = np.cos(ang)
    # temb is only ever an MXU operand -> store bf16.
    return tuple(coeffs), jnp.asarray(temb, dtype=jnp.bfloat16)


# --------------- single fused kernel: conditioning + unrolled DDIM ----------
def _fused_ddim_kernel(x_ref, wcond_ref, bcond_ref, wc1_ref, wc2_ref, b1_ref,
                       wz_ref, wt_ref, w2_ref, b2_ref, temb_ref, z0_ref,
                       noise_ref, o_ref, *, coeffs):
    # ---- step-invariant work (runs once; kernel has a single grid step) ----
    # c = tanh([rgb; infrared] @ W_cond + b)   -> (2, COND_DIM), f32
    c = jnp.tanh(
        jnp.dot(x_ref[...], wcond_ref[...],
                preferred_element_type=jnp.float32)
        + bcond_ref[...])
    c_bf = c.astype(jnp.bfloat16)
    # cond_bias = c1 @ Wc1 + c2 @ Wc2          -> (1, HIDDEN), f32
    cond_bias = (
        jnp.dot(c_bf[0:1, :], wc1_ref[...], preferred_element_type=jnp.float32)
        + jnp.dot(c_bf[1:2, :], wc2_ref[...],
                  preferred_element_type=jnp.float32))
    # Hoisted per-step first-layer bias: temb @ W_t + b1 + cond_bias
    # -> (rows, HIDDEN); one (8,128)x(128,256) matmul for ALL steps.
    bias_all = (
        jnp.dot(temb_ref[...], wt_ref[...], preferred_element_type=jnp.float32)
        + b1_ref[...] + cond_bias)

    # ---- fully unrolled DDIM loop (2 MXU matmuls per step, K=256) ----------
    z = z0_ref[...]                                           # (1, Z_DIM) f32
    for step, (c_z, c_eps, c_noise) in enumerate(coeffs):
        h = jnp.maximum(
            jnp.dot(z.astype(jnp.bfloat16), wz_ref[...],
                    preferred_element_type=jnp.float32)
            + bias_all[step:step + 1, :], 0.0)                # (1, HIDDEN) f32
        eps = (jnp.dot(h.astype(jnp.bfloat16), w2_ref[...],
                       preferred_element_type=jnp.float32)
               + b2_ref[...])                                 # (1, Z_DIM) f32
        # Folded DDIM (eta=1.0) update, coefficients are compile-time consts.
        z = c_z * z + c_eps * eps + c_noise * noise_ref[step:step + 1, :]

    o_ref[...] = z                                            # write once


def _sample_impl(x, params, temb_tbl, z0, noise, *, coeffs):
    rows = temb_tbl.shape[0]
    c2 = lambda i: (0, 0)            # single block per array, fetched once
    kernel = functools.partial(_fused_ddim_kernel, coeffs=coeffs)
    return pl.pallas_call(
        kernel,
        out_shape=jax.ShapeDtypeStruct((1, Z_DIM), jnp.float32),
        grid=(1,),
        in_specs=[
            pl.BlockSpec((2, IMG_FLAT), c2),                  # rgb+ir stacked
            pl.BlockSpec((IMG_FLAT, COND_DIM), c2),           # w_cond (bf16)
            pl.BlockSpec((1, COND_DIM), c2),                  # b_cond (f32)
            pl.BlockSpec((COND_DIM, HIDDEN), c2),             # wc1 (bf16)
            pl.BlockSpec((COND_DIM, HIDDEN), c2),             # wc2 (bf16)
            pl.BlockSpec((1, HIDDEN), c2),                    # b1 (f32)
            pl.BlockSpec((Z_DIM, HIDDEN), c2),                # w_z (bf16)
            pl.BlockSpec((T_DIM, HIDDEN), c2),                # w_t (bf16)
            pl.BlockSpec((HIDDEN, Z_DIM), c2),                # w2 (bf16)
            pl.BlockSpec((1, Z_DIM), c2),                     # b2 (f32)
            pl.BlockSpec((rows, T_DIM), c2),                  # temb table bf16
            pl.BlockSpec((1, Z_DIM), c2),                     # z0 (x_T) f32
            pl.BlockSpec((rows, Z_DIM), c2),                  # noise table f32
        ],
        out_specs=pl.BlockSpec((1, Z_DIM), c2),
        compiler_params=pltpu.CompilerParams(
            dimension_semantics=("arbitrary",)),
    )(x, params["w_cond"], params["b_cond"], params["wc1"], params["wc2"],
      params["b1"], params["w_z"], params["w_t"], params["w2"], params["b2"],
      temb_tbl, z0, noise)


_sample = jax.jit(_sample_impl, static_argnames=("coeffs",))


# ----------------------------- params & forward ------------------------------
def init_params(key):
    ks = jax.random.split(key, 6)
    s = lambda fan_in: 1.0 / math.sqrt(fan_in)
    return {
        # MXU operands in bf16 (f32 accumulation in-kernel); biases stay f32.
        "w_cond": (jax.random.normal(ks[0], (IMG_FLAT, COND_DIM), jnp.float32)
                   * s(IMG_FLAT)).astype(jnp.bfloat16),
        "b_cond": jnp.zeros((1, COND_DIM), jnp.float32),
        "wc1": (jax.random.normal(ks[2], (COND_DIM, HIDDEN), jnp.float32)
                * s(COND_DIM)).astype(jnp.bfloat16),
        "wc2": (jax.random.normal(ks[3], (COND_DIM, HIDDEN), jnp.float32)
                * s(COND_DIM)).astype(jnp.bfloat16),
        "b1": jnp.zeros((1, HIDDEN), jnp.float32),
        "w_z": (jax.random.normal(ks[1], (Z_DIM, HIDDEN), jnp.float32)
                * s(Z_DIM)).astype(jnp.bfloat16),
        "w_t": (jax.random.normal(ks[4], (T_DIM, HIDDEN), jnp.float32)
                * s(T_DIM)).astype(jnp.bfloat16),
        "w2": (jax.random.normal(ks[5], (HIDDEN, Z_DIM), jnp.float32)
               * s(HIDDEN)).astype(jnp.bfloat16),
        "b2": jnp.zeros((1, Z_DIM), jnp.float32),
    }


def inferen_forward(batch, params, steps, key):
    # Host-side schedule (numpy -> Python constants); no device->host syncs.
    coeffs, temb_tbl = _ddim_schedule(steps)

    zkey, nkey = jax.random.split(key)
    z0 = jax.random.normal(zkey, (1, Z_DIM), jnp.float32)           # x_T
    noise = jax.random.normal(nkey, (temb_tbl.shape[0], Z_DIM), jnp.float32)

    # Stack rgb + infrared -> single conditioning matmul (2 rows).
    x = jnp.concatenate(
        [batch["rgb"].reshape(1, IMG_FLAT),
         batch["infrared"].reshape(1, IMG_FLAT)], axis=0).astype(jnp.bfloat16)

    z = _sample(x, params, temb_tbl, z0, noise, coeffs=coeffs)
    return z.reshape(1, LAT_C, LAT_H, LAT_W)       # samples_ddim, latent NCHW


# --------------------------------- main ---------------------------------------
if __name__ == "__main__":
    key = jax.random.PRNGKey(0)
    pkey, rgb_key, ir_key, skey = jax.random.split(key, 4)

    params = init_params(pkey)
    batch = {
        "rgb":      jax.random.normal(rgb_key, (1, IMG_C, IMG_H, IMG_W), jnp.float32),
        "infrared": jax.random.normal(ir_key,  (1, IMG_C, IMG_H, IMG_W), jnp.float32),
    }

    samples = inferen_forward(batch, params, DDIM_STEPS, skey)
    samples = jax.block_until_ready(samples)
    assert samples.shape == (1, LAT_C, LAT_H, LAT_W)
    assert bool(jnp.all(jnp.isfinite(samples)))
    print("KERNEL_OK")
</pallas_src>

<mosaic_0001>
module attributes {stable_mosaic.version = 11 : i64} {
  func.func @_fused_ddim_kernel(%arg0: i32, %arg1: memref<2x768xbf16, #tpu.memory_space<vmem>>, %arg2: memref<768x128xbf16, #tpu.memory_space<vmem>>, %arg3: memref<1x128xf32, #tpu.memory_space<vmem>>, %arg4: memref<128x256xbf16, #tpu.memory_space<vmem>>, %arg5: memref<128x256xbf16, #tpu.memory_space<vmem>>, %arg6: memref<1x256xf32, #tpu.memory_space<vmem>>, %arg7: memref<256x256xbf16, #tpu.memory_space<vmem>>, %arg8: memref<128x256xbf16, #tpu.memory_space<vmem>>, %arg9: memref<256x256xbf16, #tpu.memory_space<vmem>>, %arg10: memref<1x256xf32, #tpu.memory_space<vmem>>, %arg11: memref<8x128xbf16, #tpu.memory_space<vmem>>, %arg12: memref<1x256xf32, #tpu.memory_space<vmem>>, %arg13: memref<8x256xf32, #tpu.memory_space<vmem>>, %arg14: memref<1x256xf32, #tpu.memory_space<vmem>>) attributes {dimension_semantics = [#tpu.dimension_semantics<arbitrary>], iteration_bounds = array<i64: 1>, scalar_prefetch = 0 : i64, scratch_operands = 0 : i64, tpu.core_type = #tpu.core_type<tc>, window_params = [{pipeline_mode = #tpu.pipeline_mode<synchronous>, transform_indices = @transform_0, window_bounds = array<i64: 2, 768>}, {pipeline_mode = #tpu.pipeline_mode<synchronous>, transform_indices = @transform_1, window_bounds = array<i64: 768, 128>}, {pipeline_mode = #tpu.pipeline_mode<synchronous>, transform_indices = @transform_2, window_bounds = array<i64: 1, 128>}, {pipeline_mode = #tpu.pipeline_mode<synchronous>, transform_indices = @transform_3, window_bounds = array<i64: 128, 256>}, {pipeline_mode = #tpu.pipeline_mode<synchronous>, transform_indices = @transform_4, window_bounds = array<i64: 128, 256>}, {pipeline_mode = #tpu.pipeline_mode<synchronous>, transform_indices = @transform_5, window_bounds = array<i64: 1, 256>}, {pipeline_mode = #tpu.pipeline_mode<synchronous>, transform_indices = @transform_6, window_bounds = array<i64: 256, 256>}, {pipeline_mode = #tpu.pipeline_mode<synchronous>, transform_indices = @transform_7, window_bounds = array<i64: 128, 256>}, {pipeline_mode = #tpu.pipeline_mode<synchronous>, transform_indices = @transform_8, window_bounds = array<i64: 256, 256>}, {pipeline_mode = #tpu.pipeline_mode<synchronous>, transform_indices = @transform_9, window_bounds = array<i64: 1, 256>}, {pipeline_mode = #tpu.pipeline_mode<synchronous>, transform_indices = @transform_10, window_bounds = array<i64: 8, 128>}, {pipeline_mode = #tpu.pipeline_mode<synchronous>, transform_indices = @transform_11, window_bounds = array<i64: 1, 256>}, {pipeline_mode = #tpu.pipeline_mode<synchronous>, transform_indices = @transform_12, window_bounds = array<i64: 8, 256>}, {pipeline_mode = #tpu.pipeline_mode<synchronous>, transform_indices = @transform_13, window_bounds = array<i64: 1, 256>}]} {
    %c0 = arith.constant 0 : index
    %c0_0 = arith.constant 0 : index
    %0 = vector.load %arg1[%c0, %c0_0] : memref<2x768xbf16, #tpu.memory_space<vmem>>, vector<2x768xbf16>
    %c0_1 = arith.constant 0 : index
    %c0_2 = arith.constant 0 : index
    %1 = vector.load %arg2[%c0_1, %c0_2] : memref<768x128xbf16, #tpu.memory_space<vmem>>, vector<768x128xbf16>
    %cst = arith.constant dense<0.000000e+00> : vector<2x128xf32>
    %2 = tpu.matmul %0, %1, %cst {dimension_numbers = #tpu.dot_dimension_numbers<[1], [0], [0], [1], [0, 0, 1, 1], [], []>} : vector<2x768xbf16>, vector<768x128xbf16>, vector<2x128xf32> -> vector<2x128xf32>
    %c0_3 = arith.constant 0 : index
    %c0_4 = arith.constant 0 : index
    %3 = vector.load %arg3[%c0_3, %c0_4] : memref<1x128xf32, #tpu.memory_space<vmem>>, vector<1x128xf32>
    %4 = vector.broadcast %3 : vector<1x128xf32> to vector<2x128xf32>
    %5 = arith.addf %2, %4 : vector<2x128xf32>
    %6 = math.tanh %5 : vector<2x128xf32>
    %7 = arith.truncf %6 : vector<2x128xf32> to vector<2x128xbf16>
    %8 = vector.extract_strided_slice %7 {offsets = [0, 0], sizes = [1, 128], strides = [1, 1]} : vector<2x128xbf16> to vector<1x128xbf16>
    %c0_5 = arith.constant 0 : index
    %c0_6 = arith.constant 0 : index
    %9 = vector.load %arg4[%c0_5, %c0_6] : memref<128x256xbf16, #tpu.memory_space<vmem>>, vector<128x256xbf16>
    %cst_7 = arith.constant dense<0.000000e+00> : vector<1x256xf32>
    %10 = tpu.matmul %8, %9, %cst_7 {dimension_numbers = #tpu.dot_dimension_numbers<[1], [0], [0], [1], [0, 0, 1, 1], [], []>} : vector<1x128xbf16>, vector<128x256xbf16>, vector<1x256xf32> -> vector<1x256xf32>
    %11 = vector.extract_strided_slice %7 {offsets = [1, 0], sizes = [1, 128], strides = [1, 1]} : vector<2x128xbf16> to vector<1x128xbf16>
    %c0_8 = arith.constant 0 : index
    %c0_9 = arith.constant 0 : index
    %12 = vector.load %arg5[%c0_8, %c0_9] : memref<128x256xbf16, #tpu.memory_space<vmem>>, vector<128x256xbf16>
    %cst_10 = arith.constant dense<0.000000e+00> : vector<1x256xf32>
    %13 = tpu.matmul %11, %12, %cst_10 {dimension_numbers = #tpu.dot_dimension_numbers<[1], [0], [0], [1], [0, 0, 1, 1], [], []>} : vector<1x128xbf16>, vector<128x256xbf16>, vector<1x256xf32> -> vector<1x256xf32>
    %14 = arith.addf %10, %13 : vector<1x256xf32>
    %c0_11 = arith.constant 0 : index
    %c0_12 = arith.constant 0 : index
    %15 = vector.load %arg11[%c0_11, %c0_12] : memref<8x128xbf16, #tpu.memory_space<vmem>>, vector<8x128xbf16>
    %c0_13 = arith.constant 0 : index
    %c0_14 = arith.constant 0 : index
    %16 = vector.load %arg8[%c0_13, %c0_14] : memref<128x256xbf16, #tpu.memory_space<vmem>>, vector<128x256xbf16>
    %cst_15 = arith.constant dense<0.000000e+00> : vector<8x256xf32>
    %17 = tpu.matmul %15, %16, %cst_15 {dimension_numbers = #tpu.dot_dimension_numbers<[1], [0], [0], [1], [0, 0, 1, 1], [], []>} : vector<8x128xbf16>, vector<128x256xbf16>, vector<8x256xf32> -> vector<8x256xf32>
    %c0_16 = arith.constant 0 : index
    %c0_17 = arith.constant 0 : index
    %18 = vector.load %arg6[%c0_16, %c0_17] : memref<1x256xf32, #tpu.memory_space<vmem>>, vector<1x256xf32>
    %19 = vector.broadcast %18 : vector<1x256xf32> to vector<8x256xf32>
    %20 = arith.addf %17, %19 : vector<8x256xf32>
    %21 = vector.broadcast %14 : vector<1x256xf32> to vector<8x256xf32>
    %22 = arith.addf %20, %21 : vector<8x256xf32>
    %c0_18 = arith.constant 0 : index
    %c0_19 = arith.constant 0 : index
    %23 = vector.load %arg12[%c0_18, %c0_19] : memref<1x256xf32, #tpu.memory_space<vmem>>, vector<1x256xf32>
    %24 = arith.truncf %23 : vector<1x256xf32> to vector<1x256xbf16>
    %c0_20 = arith.constant 0 : index
    %c0_21 = arith.constant 0 : index
    %25 = vector.load %arg7[%c0_20, %c0_21] : memref<256x256xbf16, #tpu.memory_space<vmem>>, vector<256x256xbf16>
    %cst_22 = arith.constant dense<0.000000e+00> : vector<1x256xf32>
    %26 = tpu.matmul %24, %25, %cst_22 {dimension_numbers = #tpu.dot_dimension_numbers<[1], [0], [0], [1], [0, 0, 1, 1], [], []>} : vector<1x256xbf16>, vector<256x256xbf16>, vector<1x256xf32> -> vector<1x256xf32>
    %27 = vector.extract_strided_slice %22 {offsets = [0, 0], sizes = [1, 256], strides = [1, 1]} : vector<8x256xf32> to vector<1x256xf32>
    %28 = arith.addf %26, %27 : vector<1x256xf32>
    %cst_23 = arith.constant 0.000000e+00 : f32
    %29 = vector.broadcast %cst_23 : f32 to vector<1x256xf32>
    %30 = arith.maximumf %28, %29 : vector<1x256xf32>
    %31 = arith.truncf %30 : vector<1x256xf32> to vector<1x256xbf16>
    %c0_24 = arith.constant 0 : index
    %c0_25 = arith.constant 0 : index
    %32 = vector.load %arg9[%c0_24, %c0_25] : memref<256x256xbf16, #tpu.memory_space<vmem>>, vector<256x256xbf16>
    %cst_26 = arith.constant dense<0.000000e+00> : vector<1x256xf32>
    %33 = tpu.matmul %31, %32, %cst_26 {dimension_numbers = #tpu.dot_dimension_numbers<[1], [0], [0], [1], [0, 0, 1, 1], [], []>} : vector<1x256xbf16>, vector<256x256xbf16>, vector<1x256xf32> -> vector<1x256xf32>
    %c0_27 = arith.constant 0 : index
    %c0_28 = arith.constant 0 : index
    %34 = vector.load %arg10[%c0_27, %c0_28] : memref<1x256xf32, #tpu.memory_space<vmem>>, vector<1x256xf32>
    %35 = arith.addf %33, %34 : vector<1x256xf32>
    %cst_29 = arith.constant 4.12657595 : f32
    %36 = vector.broadcast %cst_29 : f32 to vector<1x256xf32>
    %37 = arith.mulf %36, %23 : vector<1x256xf32>
    %cst_30 = arith.constant -3.88712811 : f32
    %38 = vector.broadcast %cst_30 : f32 to vector<1x256xf32>
    %39 = arith.mulf %38, %35 : vector<1x256xf32>
    %40 = arith.addf %37, %39 : vector<1x256xf32>
    %c0_31 = arith.constant 0 : index
    %c0_32 = arith.constant 0 : index
    %41 = vector.load %arg13[%c0_31, %c0_32] : memref<8x256xf32, #tpu.memory_space<vmem>>, vector<1x256xf32>
    %cst_33 = arith.constant 0.958573341 : f32
    %42 = vector.broadcast %cst_33 : f32 to vector<1x256xf32>
    %43 = arith.mulf %42, %41 : vector<1x256xf32>
    %44 = arith.addf %40, %43 : vector<1x256xf32>
    %45 = arith.truncf %44 : vector<1x256xf32> to vector<1x256xbf16>
    %c0_34 = arith.constant 0 : index
    %c0_35 = arith.constant 0 : index
    %46 = vector.load %arg7[%c0_34, %c0_35] : memref<256x256xbf16, #tpu.memory_space<vmem>>, vector<256x256xbf16>
    %cst_36 = arith.constant dense<0.000000e+00> : vector<1x256xf32>
    %47 = tpu.matmul %45, %46, %cst_36 {dimension_numbers = #tpu.dot_dimension_numbers<[1], [0], [0], [1], [0, 0, 1, 1], [], []>} : vector<1x256xbf16>, vector<256x256xbf16>, vector<1x256xf32> -> vector<1x256xf32>
    %48 = vector.extract_strided_slice %22 {offsets = [1, 0], sizes = [1, 256], strides = [1, 1]} : vector<8x256xf32> to vector<1x256xf32>
    %49 = arith.addf %47, %48 : vector<1x256xf32>
    %cst_37 = arith.constant 0.000000e+00 : f32
    %50 = vector.broadcast %cst_37 : f32 to vector<1x256xf32>
    %51 = arith.maximumf %49, %50 : vector<1x256xf32>
    %52 = arith.truncf %51 : vector<1x256xf32> to vector<1x256xbf16>
    %c0_38 = arith.constant 0 : index
    %c0_39 = arith.constant 0 : index
    %53 = vector.load %arg9[%c0_38, %c0_39] : memref<256x256xbf16, #tpu.memory_space<vmem>>, vector<256x256xbf16>
    %cst_40 = arith.constant dense<0.000000e+00> : vector<1x256xf32>
    %54 = tpu.matmul %52, %53, %cst_40 {dimension_numbers = #tpu.dot_dimension_numbers<[1], [0], [0], [1], [0, 0, 1, 1], [], []>} : vector<1x256xbf16>, vector<256x256xbf16>, vector<1x256xf32> -> vector<1x256xf32>
    %c0_41 = arith.constant 0 : index
    %c0_42 = arith.constant 0 : index
    %55 = vector.load %arg10[%c0_41, %c0_42] : memref<1x256xf32, #tpu.memory_space<vmem>>, vector<1x256xf32>
    %56 = arith.addf %54, %55 : vector<1x256xf32>
    %cst_43 = arith.constant 2.75709128 : f32
    %57 = vector.broadcast %cst_43 : f32 to vector<1x256xf32>
    %58 = arith.mulf %57, %44 : vector<1x256xf32>
    %cst_44 = arith.constant -2.42521501 : f32
    %59 = vector.broadcast %cst_44 : f32 to vector<1x256xf32>
    %60 = arith.mulf %59, %56 : vector<1x256xf32>
    %61 = arith.addf %58, %60 : vector<1x256xf32>
    %c1 = arith.constant 1 : index
    %c0_45 = arith.constant 0 : index
    %62 = vector.load %arg13[%c1, %c0_45] : memref<8x256xf32, #tpu.memory_space<vmem>>, vector<1x256xf32>
    %cst_46 = arith.constant 0.848459661 : f32
    %63 = vector.broadcast %cst_46 : f32 to vector<1x256xf32>
    %64 = arith.mulf %63, %62 : vector<1x256xf32>
    %65 = arith.addf %61, %64 : vector<1x256xf32>
    %66 = arith.truncf %65 : vector<1x256xf32> to vector<1x256xbf16>
    %c0_47 = arith.constant 0 : index
    %c0_48 = arith.constant 0 : index
    %67 = vector.load %arg7[%c0_47, %c0_48] : memref<256x256xbf16, #tpu.memory_space<vmem>>, vector<256x256xbf16>
    %cst_49 = arith.constant dense<0.000000e+00> : vector<1x256xf32>
    %68 = tpu.matmul %66, %67, %cst_49 {dimension_numbers = #tpu.dot_dimension_numbers<[1], [0], [0], [1], [0, 0, 1, 1], [], []>} : vector<1x256xbf16>, vector<256x256xbf16>, vector<1x256xf32> -> vector<1x256xf32>
    %69 = vector.extract_strided_slice %22 {offsets = [2, 0], sizes = [1, 256], strides = [1, 1]} : vector<8x256xf32> to vector<1x256xf32>
    %70 = arith.addf %68, %69 : vector<1x256xf32>
    %cst_50 = arith.constant 0.000000e+00 : f32
    %71 = vector.broadcast %cst_50 : f32 to vector<1x256xf32>
    %72 = arith.maximumf %70, %71 : vector<1x256xf32>
    %73 = arith.truncf %72 : vector<1x256xf32> to vector<1x256xbf16>
    %c0_51 = arith.constant 0 : index
    %c0_52 = arith.constant 0 : index
    %74 = vector.load %arg9[%c0_51, %c0_52] : memref<256x256xbf16, #tpu.memory_space<vmem>>, vector<256x256xbf16>
    %cst_53 = arith.constant dense<0.000000e+00> : vector<1x256xf32>
    %75 = tpu.matmul %73, %74, %cst_53 {dimension_numbers = #tpu.dot_dimension_numbers<[1], [0], [0], [1], [0, 0, 1, 1], [], []>} : vector<1x256xbf16>, vector<256x256xbf16>, vector<1x256xf32> -> vector<1x256xf32>
    %c0_54 = arith.constant 0 : index
    %c0_55 = arith.constant 0 : index
    %76 = vector.load %arg10[%c0_54, %c0_55] : memref<1x256xf32, #tpu.memory_space<vmem>>, vector<1x256xf32>
    %77 = arith.addf %75, %76 : vector<1x256xf32>
    %cst_56 = arith.constant 1.84508288 : f32
    %78 = vector.broadcast %cst_56 : f32 to vector<1x256xf32>
    %79 = arith.mulf %78, %65 : vector<1x256xf32>
    %cst_57 = arith.constant -1.4496876 : f32
    %80 = vector.broadcast %cst_57 : f32 to vector<1x256xf32>
    %81 = arith.mulf %80, %77 : vector<1x256xf32>
    %82 = arith.addf %79, %81 : vector<1x256xf32>
    %c2 = arith.constant 2 : index
    %c0_58 = arith.constant 0 : index
    %83 = vector.load %arg13[%c2, %c0_58] : memref<8x256xf32, #tpu.memory_space<vmem>>, vector<1x256xf32>
    %cst_59 = arith.constant 0.550215364 : f32
    %84 = vector.broadcast %cst_59 : f32 to vector<1x256xf32>
    %85 = arith.mulf %84, %83 : vector<1x256xf32>
    %86 = arith.addf %82, %85 : vector<1x256xf32>
    %87 = arith.truncf %86 : vector<1x256xf32> to vector<1x256xbf16>
    %c0_60 = arith.constant 0 : index
    %c0_61 = arith.constant 0 : index
    %88 = vector.load %arg7[%c0_60, %c0_61] : memref<256x256xbf16, #tpu.memory_space<vmem>>, vector<256x256xbf16>
    %cst_62 = arith.constant dense<0.000000e+00> : vector<1x256xf32>
    %89 = tpu.matmul %87, %88, %cst_62 {dimension_numbers = #tpu.dot_dimension_numbers<[1], [0], [0], [1], [0, 0, 1, 1], [], []>} : vector<1x256xbf16>, vector<256x256xbf16>, vector<1x256xf32> -> vector<1x256xf32>
    %90 = vector.extract_strided_slice %22 {offsets = [3, 0], sizes = [1, 256], strides = [1, 1]} : vector<8x256xf32> to vector<1x256xf32>
    %91 = arith.addf %89, %90 : vector<1x256xf32>
    %cst_63 = arith.constant 0.000000e+00 : f32
    %92 = vector.broadcast %cst_63 : f32 to vector<1x256xf32>
    %93 = arith.maximumf %91, %92 : vector<1x256xf32>
    %94 = arith.truncf %93 : vector<1x256xf32> to vector<1x256xbf16>
    %c0_64 = arith.constant 0 : index
    %c0_65 = arith.constant 0 : index
    %95 = vector.load %arg9[%c0_64, %c0_65] : memref<256x256xbf16, #tpu.memory_space<vmem>>, vector<256x256xbf16>
    %cst_66 = arith.constant dense<0.000000e+00> : vector<1x256xf32>
    %96 = tpu.matmul %94, %95, %cst_66 {dimension_numbers = #tpu.dot_dimension_numbers<[1], [0], [0], [1], [0, 0, 1, 1], [], []>} : vector<1x256xbf16>, vector<256x256xbf16>, vector<1x256xf32> -> vector<1x256xf32>
    %c0_67 = arith.constant 0 : index
    %c0_68 = arith.constant 0 : index
    %97 = vector.load %arg10[%c0_67, %c0_68] : memref<1x256xf32, #tpu.memory_space<vmem>>, vector<1x256xf32>
    %98 = arith.addf %96, %97 : vector<1x256xf32>
    %cst_69 = arith.constant 1.23674023 : f32
    %99 = vector.broadcast %cst_69 : f32 to vector<1x256xf32>
    %100 = arith.mulf %99, %86 : vector<1x256xf32>
    %cst_70 = arith.constant -0.727534533 : f32
    %101 = vector.broadcast %cst_70 : f32 to vector<1x256xf32>
    %102 = arith.mulf %101, %98 : vector<1x256xf32>
    %103 = arith.addf %100, %102 : vector<1x256xf32>
    %c3 = arith.constant 3 : index
    %c0_71 = arith.constant 0 : index
    %104 = vector.load %arg13[%c3, %c0_71] : memref<8x256xf32, #tpu.memory_space<vmem>>, vector<1x256xf32>
    %cst_72 = arith.constant 0.0148262149 : f32
    %105 = vector.broadcast %cst_72 : f32 to vector<1x256xf32>
    %106 = arith.mulf %105, %104 : vector<1x256xf32>
    %107 = arith.addf %103, %106 : vector<1x256xf32>
    %108 = arith.truncf %107 : vector<1x256xf32> to vector<1x256xbf16>
    %c0_73 = arith.constant 0 : index
    %c0_74 = arith.constant 0 : index
    %109 = vector.load %arg7[%c0_73, %c0_74] : memref<256x256xbf16, #tpu.memory_space<vmem>>, vector<256x256xbf16>
    %cst_75 = arith.constant dense<0.000000e+00> : vector<1x256xf32>
    %110 = tpu.matmul %108, %109, %cst_75 {dimension_numbers = #tpu.dot_dimension_numbers<[1], [0], [0], [1], [0, 0, 1, 1], [], []>} : vector<1x256xbf16>, vector<256x256xbf16>, vector<1x256xf32> -> vector<1x256xf32>
    %111 = vector.extract_strided_slice %22 {offsets = [4, 0], sizes = [1, 256], strides = [1, 1]} : vector<8x256xf32> to vector<1x256xf32>
    %112 = arith.addf %110, %111 : vector<1x256xf32>
    %cst_76 = arith.constant 0.000000e+00 : f32
    %113 = vector.broadcast %cst_76 : f32 to vector<1x256xf32>
    %114 = arith.maximumf %112, %113 : vector<1x256xf32>
    %115 = arith.truncf %114 : vector<1x256xf32> to vector<1x256xbf16>
    %c0_77 = arith.constant 0 : index
    %c0_78 = arith.constant 0 : index
    %116 = vector.load %arg9[%c0_77, %c0_78] : memref<256x256xbf16, #tpu.memory_space<vmem>>, vector<256x256xbf16>
    %cst_79 = arith.constant dense<0.000000e+00> : vector<1x256xf32>
    %117 = tpu.matmul %115, %116, %cst_79 {dimension_numbers = #tpu.dot_dimension_numbers<[1], [0], [0], [1], [0, 0, 1, 1], [], []>} : vector<1x256xbf16>, vector<256x256xbf16>, vector<1x256xf32> -> vector<1x256xf32>
    %c0_80 = arith.constant 0 : index
    %c0_81 = arith.constant 0 : index
    %118 = vector.load %arg10[%c0_80, %c0_81] : memref<1x256xf32, #tpu.memory_space<vmem>>, vector<1x256xf32>
    %119 = arith.addf %117, %118 : vector<1x256xf32>
    %cst_82 = arith.constant 1.000110e+00 : f32
    %120 = vector.broadcast %cst_82 : f32 to vector<1x256xf32>
    %121 = arith.mulf %120, %107 : vector<1x256xf32>
    %cst_83 = arith.constant -0.0148309236 : f32
    %122 = vector.broadcast %cst_83 : f32 to vector<1x256xf32>
    %123 = arith.mulf %122, %119 : vector<1x256xf32>
    %124 = arith.addf %121, %123 : vector<1x256xf32>
    %c4 = arith.constant 4 : index
    %c0_84 = arith.constant 0 : index
    %125 = vector.load %arg13[%c4, %c0_84] : memref<8x256xf32, #tpu.memory_space<vmem>>, vector<1x256xf32>
    %cst_85 = arith.constant 0.000000e+00 : f32
    %126 = vector.broadcast %cst_85 : f32 to vector<1x256xf32>
    %127 = arith.mulf %126, %125 : vector<1x256xf32>
    %128 = arith.addf %124, %127 : vector<1x256xf32>
    %c0_86 = arith.constant 0 : index
    %c0_87 = arith.constant 0 : index
    %129 = vector.load %arg14[%c0_86, %c0_87] : memref<1x256xf32, #tpu.memory_space<vmem>>, vector<1x256xf32>
    tpu.vector_store %arg14[%c0_86, %c0_87], %128 {strides = array<i32>} : memref<1x256xf32, #tpu.memory_space<vmem>>, vector<1x256xf32>,
    return
  }
  func.func @transform_0(%arg0: i32) -> (i32, i32) {
    %c0_i32 = arith.constant 0 : i32
    %c0_i32_0 = arith.constant 0 : i32
    %c0_i32_1 = arith.constant 0 : i32
    return %c0_i32, %c0_i32_0 : i32, i32
  }
  func.func @transform_1(%arg0: i32) -> (i32, i32) {
    %c0_i32 = arith.constant 0 : i32
    %c0_i32_0 = arith.constant 0 : i32
    %c0_i32_1 = arith.constant 0 : i32
    return %c0_i32, %c0_i32_0 : i32, i32
  }
  func.func @transform_2(%arg0: i32) -> (i32, i32) {
    %c0_i32 = arith.constant 0 : i32
    %c0_i32_0 = arith.constant 0 : i32
    %c0_i32_1 = arith.constant 0 : i32
    return %c0_i32, %c0_i32_0 : i32, i32
  }
  func.func @transform_3(%arg0: i32) -> (i32, i32) {
    %c0_i32 = arith.constant 0 : i32
    %c0_i32_0 = arith.constant 0 : i32
    %c0_i32_1 = arith.constant 0 : i32
    return %c0_i32, %c0_i32_0 : i32, i32
  }
  func.func @transform_4(%arg0: i32) -> (i32, i32) {
    %c0_i32 = arith.constant 0 : i32
    %c0_i32_0 = arith.constant 0 : i32
    %c0_i32_1 = arith.constant 0 : i32
    return %c0_i32, %c0_i32_0 : i32, i32
  }
  func.func @transform_5(%arg0: i32) -> (i32, i32) {
    %c0_i32 = arith.constant 0 : i32
    %c0_i32_0 = arith.constant 0 : i32
    %c0_i32_1 = arith.constant 0 : i32
    return %c0_i32, %c0_i32_0 : i32, i32
  }
  func.func @transform_6(%arg0: i32) -> (i32, i32) {
    %c0_i32 = arith.constant 0 : i32
    %c0_i32_0 = arith.constant 0 : i32
    %c0_i32_1 = arith.constant 0 : i32
    return %c0_i32, %c0_i32_0 : i32, i32
  }
  func.func @transform_7(%arg0: i32) -> (i32, i32) {
    %c0_i32 = arith.constant 0 : i32
    %c0_i32_0 = arith.constant 0 : i32
    %c0_i32_1 = arith.constant 0 : i32
    return %c0_i32, %c0_i32_0 : i32, i32
  }
  func.func @transform_8(%arg0: i32) -> (i32, i32) {
    %c0_i32 = arith.constant 0 : i32
    %c0_i32_0 = arith.constant 0 : i32
    %c0_i32_1 = arith.constant 0 : i32
    return %c0_i32, %c0_i32_0 : i32, i32
  }
  func.func @transform_9(%arg0: i32) -> (i32, i32) {
    %c0_i32 = arith.constant 0 : i32
    %c0_i32_0 = arith.constant 0 : i32
    %c0_i32_1 = arith.constant 0 : i32
    return %c0_i32, %c0_i32_0 : i32, i32
  }
  func.func @transform_10(%arg0: i32) -> (i32, i32) {
    %c0_i32 = arith.constant 0 : i32
    %c0_i32_0 = arith.constant 0 : i32
    %c0_i32_1 = arith.constant 0 : i32
    return %c0_i32, %c0_i32_0 : i32, i32
  }
  func.func @transform_11(%arg0: i32) -> (i32, i32) {
    %c0_i32 = arith.constant 0 : i32
    %c0_i32_0 = arith.constant 0 : i32
    %c0_i32_1 = arith.constant 0 : i32
    return %c0_i32, %c0_i32_0 : i32, i32
  }
  func.func @transform_12(%arg0: i32) -> (i32, i32) {
    %c0_i32 = arith.constant 0 : i32
    %c0_i32_0 = arith.constant 0 : i32
    %c0_i32_1 = arith.constant 0 : i32
    return %c0_i32, %c0_i32_0 : i32, i32
  }
  func.func @transform_13(%arg0: i32) -> (i32, i32) {
    %c0_i32 = arith.constant 0 : i32
    %c0_i32_0 = arith.constant 0 : i32
    %c0_i32_1 = arith.constant 0 : i32
    return %c0_i32, %c0_i32_0 : i32, i32
  }
}

</mosaic_0001>

<llo_original>
// kernel: _sample_impl.1
$region0: #{_sample_impl.1}
  #allocation0 [shape = 'u32[]', space=smem, size = 0x4, offset = 0x4, fixed_abs, tag = 'smem constant byte address 0x4 - core index']
  #allocation1 [shape = 'u32[144,128]{1,0:T(1,128)}', space=vmem, size = 0x12000, scoped, tag = 'internal scratch']
  %s0 = inlined_call_operand.hbm [shape: bf16[2,768], index: 0, kind: input, shape index: {}]
  %s1 = inlined_call_operand.hbm [shape: bf16[768,128], index: 1, kind: input, shape index: {}]
  %s2 = inlined_call_operand.vmem [shape: f32[1,128], index: 2, kind: input, shape index: {}]
  %s3 = inlined_call_operand.hbm [shape: bf16[128,256], index: 3, kind: input, shape index: {}]
  %s4 = inlined_call_operand.hbm [shape: bf16[128,256], index: 4, kind: input, shape index: {}]
  %s5 = inlined_call_operand.hbm [shape: f32[1,256], index: 5, kind: input, shape index: {}]
  %s6 = inlined_call_operand.hbm [shape: bf16[256,256], index: 6, kind: input, shape index: {}]
  %s7 = inlined_call_operand.hbm [shape: bf16[128,256], index: 7, kind: input, shape index: {}]
  %s8 = inlined_call_operand.hbm [shape: bf16[256,256], index: 8, kind: input, shape index: {}]
  %s9 = inlined_call_operand.hbm [shape: f32[1,256], index: 9, kind: input, shape index: {}]
  %s10 = inlined_call_operand.vmem [shape: bf16[8,128], index: 10, kind: input, shape index: {}]
  %s11 = inlined_call_operand.hbm [shape: f32[1,256], index: 11, kind: input, shape index: {}]
  %s12 = inlined_call_operand.vmem [shape: f32[8,256], index: 12, kind: input, shape index: {}]
  %s13 = inlined_call_operand.hbm [shape: f32[1,256], index: 13, kind: output, shape index: {}]
  %s14 = sld [smem:[#allocation0]]
  $region102: #{_sample_impl.1} parent=0
    _
  %s16 = ssub.s32 1, %s14
  %s17 = scalar_select 0, %s16, %s14
  $region1: #{_sample_impl.1} parent=0
    #allocation2 [shape = 'u8[3072]{0}', space=vmem, size = 0xc00, scoped, tag = 'input window, operand 0, single buffered']
    #allocation3 [shape = 's32[1]{0}', space=sflag, size = 0x4, scoped, tag = 'scoped memory for _sample_impl.1']
    #allocation4 [shape = 's32[1]{0}', space=sflag, size = 0x4, scoped, tag = 'scoped memory for _sample_impl.1']
    #allocation5 [shape = 'u8[196608]{0}', space=vmem, size = 0x30000, scoped, tag = 'input window, operand 1, single buffered']
    #allocation6 [shape = 's32[1]{0}', space=sflag, size = 0x4, scoped, tag = 'scoped memory for _sample_impl.1']
    #allocation7 [shape = 'u8[65536]{0}', space=vmem, size = 0x10000, scoped, tag = 'input window, operand 3, single buffered']
    #allocation8 [shape = 'u8[65536]{0}', space=vmem, size = 0x10000, scoped, tag = 'input window, operand 4, single buffered']
    #allocation9 [shape = 's32[1]{0}', space=sflag, size = 0x4, scoped, tag = 'scoped memory for _sample_impl.1']
    #allocation10 [shape = 'u8[1024]{0}', space=vmem, size = 0x400, scoped, tag = 'input window, operand 5, single buffered']
    #allocation11 [shape = 'u8[131072]{0}', space=vmem, size = 0x20000, scoped, tag = 'input window, operand 6, single buffered']
    #allocation12 [shape = 's32[1]{0}', space=sflag, size = 0x4, scoped, tag = 'scoped memory for _sample_impl.1']
    #allocation13 [shape = 'u8[65536]{0}', space=vmem, size = 0x10000, scoped, tag = 'input window, operand 7, single buffered']
    #allocation14 [shape = 'u8[131072]{0}', space=vmem, size = 0x20000, scoped, tag = 'input window, operand 8, single buffered']
    #allocation15 [shape = 's32[1]{0}', space=sflag, size = 0x4, scoped, tag = 'scoped memory for _sample_impl.1']
    #allocation16 [shape = 'u8[1024]{0}', space=vmem, size = 0x400, scoped, tag = 'input window, operand 9, single buffered']
    #allocation17 [shape = 'u8[1024]{0}', space=vmem, size = 0x400, scoped, tag = 'input window, operand 11, single buffered']
    #allocation18 [shape = 's32[1]{0}', space=sflag, size = 0x4, scoped, tag = 'scoped memory for _sample_impl.1']
    #allocation19 [shape = 'u8[1024]{0}', space=vmem, size = 0x400, scoped, tag = 'output window, operand 0, single buffered']
    %18 = vsyncpa [#allocation3], 0
    %19 = vsyncpa [#allocation6], 0
    %20 = vsyncpa [#allocation9], 0
    %21 = vsyncpa [#allocation12], 0
    %22 = vsyncpa [#allocation15], 0
    %23 = vsyncpa [#allocation18], 0
    %24 = vsyncpa [#allocation4], 0
    // Predicated region
    $region2: #{_sample_impl.1} parent=1 // pred_check
      _
    $region3: #{_sample_impl.1} parent=1 // pred_check_branch
      %26 = sbr.rel (0) target = $region5
    $region4: #{_sample_impl.1} parent=1 // pred_region
      %s28 = ssub.s32 96, 96
      %29 = vsyncadd [#allocation3], %s28
      %s31 = sshll.u32 [#allocation2], 4
      %s32 = int_to_ptr.vmem [resolvable:$true] %s31
      %34 = dma.hbm_to_vmem [thread:$0]  %s0, 96, %s32, [#allocation3]
    $region5: #{_sample_impl.1} parent=1 // pred_fallthru
      _
    // Predicated region
    $region6: #{_sample_impl.1} parent=1 // pred_check
      _
    $region7: #{_sample_impl.1} parent=1 // pred_check_branch
      %36 = sbr.rel (0) target = $region9
    $region8: #{_sample_impl.1} parent=1 // pred_region
      %s38 = ssub.s32 6144, 6144
      %39 = vsyncadd [#allocation6], %s38
      %s40 = sshll.u32 [#allocation5], 4
      %s41 = int_to_ptr.vmem [resolvable:$true] %s40
      %46 = dma.hbm_to_vmem [thread:$0]  %s1, 6144, %s41, [#allocation6], 64, 64, 4
    $region9: #{_sample_impl.1} parent=1 // pred_fallthru
      _
    // Predicated region
    $region10: #{_sample_impl.1} parent=1 // pred_check
      _
    $region11: #{_sample_impl.1} parent=1 // pred_check_branch
      %48 = sbr.rel (0) target = $region13
    $region12: #{_sample_impl.1} parent=1 // pred_region
      _
    $region13: #{_sample_impl.1} parent=1 // pred_fallthru
      _
    // Predicated region
    $region14: #{_sample_impl.1} parent=1 // pred_check
      _
    $region15: #{_sample_impl.1} parent=1 // pred_check_branch
      %50 = sbr.rel (0) target = $region17
    $region16: #{_sample_impl.1} parent=1 // pred_region
      %s52 = ssub.s32 2048, 2048
      %53 = vsyncadd [#allocation6], %s52
      %s54 = sshll.u32 [#allocation7], 4
      %s55 = int_to_ptr.vmem [resolvable:$true] %s54
      %60 = dma.hbm_to_vmem [thread:$0]  %s3, 2048, %s55, [#allocation6], 128, 128, 8
    $region17: #{_sample_impl.1} parent=1 // pred_fallthru
      _
    // Predicated region
    $region18: #{_sample_impl.1} parent=1 // pred_check
      _
    $region19: #{_sample_impl.1} parent=1 // pred_check_branch
      %62 = sbr.rel (0) target = $region21
    $region20: #{_sample_impl.1} parent=1 // pred_region
      %s64 = ssub.s32 2048, 2048
      %65 = vsyncadd [#allocation9], %s64
      %s66 = sshll.u32 [#allocation8], 4
      %s67 = int_to_ptr.vmem [resolvable:$true] %s66
      %72 = dma.hbm_to_vmem [thread:$0]  %s4, 2048, %s67, [#allocation9], 128, 128, 8
    $region21: #{_sample_impl.1} parent=1 // pred_fallthru
      _
    // Predicated region
    $region22: #{_sample_impl.1} parent=1 // pred_check
      _
    $region23: #{_sample_impl.1} parent=1 // pred_check_branch
      %74 = sbr.rel (0) target = $region25
    $region24: #{_sample_impl.1} parent=1 // pred_region
      %s76 = ssub.s32 32, 32
      %77 = vsyncadd [#allocation9], %s76
      %s79 = sshll.u32 [#allocation10], 4
      %s80 = int_to_ptr.vmem [resolvable:$true] %s79
      %82 = dma.hbm_to_vmem [thread:$0]  %s5, 32, %s80, [#allocation9]
    $region25: #{_sample_impl.1} parent=1 // pred_fallthru
      _
    // Predicated region
    $region26: #{_sample_impl.1} parent=1 // pred_check
      _
    $region27: #{_sample_impl.1} parent=1 // pred_check_branch
      %84 = sbr.rel (0) target = $region29
    $region28: #{_sample_impl.1} parent=1 // pred_region
      %s86 = ssub.s32 4096, 4096
      %87 = vsyncadd [#allocation12], %s86
      %s88 = sshll.u32 [#allocation11], 4
      %s89 = int_to_ptr.vmem [resolvable:$true] %s88
      %94 = dma.hbm_to_vmem [thread:$0]  %s6, 4096, %s89, [#allocation12], 128, 128, 8
    $region29: #{_sample_impl.1} parent=1 // pred_fallthru
      _
    // Predicated region
    $region30: #{_sample_impl.1} parent=1 // pred_check
      _
    $region31: #{_sample_impl.1} parent=1 // pred_check_branch
      %96 = sbr.rel (0) target = $region33
    $region32: #{_sample_impl.1} parent=1 // pred_region
      %s98 = ssub.s32 2048, 2048
      %99 = vsyncadd [#allocation12], %s98
      %s100 = sshll.u32 [#allocation13], 4
      %s101 = int_to_ptr.vmem [resolvable:$true] %s100
      %106 = dma.hbm_to_vmem [thread:$0]  %s7, 2048, %s101, [#allocation12], 128, 128, 8
    $region33: #{_sample_impl.1} parent=1 // pred_fallthru
      _
    // Predicated region
    $region34: #{_sample_impl.1} parent=1 // pred_check
      _
    $region35: #{_sample_impl.1} parent=1 // pred_check_branch
      %108 = sbr.rel (0) target = $region37
    $region36: #{_sample_impl.1} parent=1 // pred_region
      %s110 = ssub.s32 4096, 4096
      %111 = vsyncadd [#allocation15], %s110
      %s112 = sshll.u32 [#allocation14], 4
      %s113 = int_to_ptr.vmem [resolvable:$true] %s112
      %118 = dma.hbm_to_vmem [thread:$0]  %s8, 4096, %s113, [#allocation15], 128, 128, 8
    $region37: #{_sample_impl.1} parent=1 // pred_fallthru
      _
    // Predicated region
    $region38: #{_sample_impl.1} parent=1 // pred_check
      _
    $region39: #{_sample_impl.1} parent=1 // pred_check_branch
      %120 = sbr.rel (0) target = $region41
    $region40: #{_sample_impl.1} parent=1 // pred_region
      %s122 = ssub.s32 32, 32
      %123 = vsyncadd [#allocation15], %s122
      %s125 = sshll.u32 [#allocation16], 4
      %s126 = int_to_ptr.vmem [resolvable:$true] %s125
      %128 = dma.hbm_to_vmem [thread:$0]  %s9, 32, %s126, [#allocation15]
    $region41: #{_sample_impl.1} parent=1 // pred_fallthru
      _
    // Predicated region
    $region42: #{_sample_impl.1} parent=1 // pred_check
      _
    $region43: #{_sample_impl.1} parent=1 // pred_check_branch
      %130 = sbr.rel (0) target = $region45
    $region44: #{_sample_impl.1} parent=1 // pred_region
      _
    $region45: #{_sample_impl.1} parent=1 // pred_fallthru
      _
    // Predicated region
    $region46: #{_sample_impl.1} parent=1 // pred_check
      _
    $region47: #{_sample_impl.1} parent=1 // pred_check_branch
      %132 = sbr.rel (0) target = $region49
    $region48: #{_sample_impl.1} parent=1 // pred_region
      %s134 = ssub.s32 32, 32
      %135 = vsyncadd [#allocation18], %s134
      %s137 = sshll.u32 [#allocation17], 4
      %s138 = int_to_ptr.vmem [resolvable:$true] %s137
      %140 = dma.hbm_to_vmem [thread:$0]  %s11, 32, %s138, [#allocation18]
    $region49: #{_sample_impl.1} parent=1 // pred_fallthru
      _
    // Predicated region
    $region50: #{_sample_impl.1} parent=1 // pred_check
      _
    $region51: #{_sample_impl.1} parent=1 // pred_check_branch
      %142 = sbr.rel (0) target = $region53
    $region52: #{_sample_impl.1} parent=1 // pred_region
      _
    $region53: #{_sample_impl.1} parent=1 // pred_fallthru
      _
    // Predicated region
    $region54: #{_sample_impl.1} parent=1 // pred_check
      _
    $region55: #{_sample_impl.1} parent=1 // pred_check_branch
      %144 = sbr.rel (0) target = $region57
    $region56: #{_sample_impl.1} parent=1 // pred_region
      %145 = dma.done [#allocation3], 96
    $region57: #{_sample_impl.1} parent=1 // pred_fallthru
      _
    // Predicated region
    $region58: #{_sample_impl.1} parent=1 // pred_check
      _
    $region59: #{_sample_impl.1} parent=1 // pred_check_branch
      %147 = sbr.rel (0) target = $region61
    $region60: #{_sample_impl.1} parent=1 // pred_region
      %148 = dma.done [#allocation6], 6144
    $region61: #{_sample_impl.1} parent=1 // pred_fallthru
      _
    // Predicated region
    $region62: #{_sample_impl.1} parent=1 // pred_check
      _
    $region63: #{_sample_impl.1} parent=1 // pred_check_branch
      %150 = sbr.rel (0) target = $region65
    $region64: #{_sample_impl.1} parent=1 // pred_region
      %151 = dma.done [#allocation6], 2048
    $region65: #{_sample_impl.1} parent=1 // pred_fallthru
      _
    // Predicated region
    $region66: #{_sample_impl.1} parent=1 // pred_check
      _
    $region67: #{_sample_impl.1} parent=1 // pred_check_branch
      %153 = sbr.rel (0) target = $region69
    $region68: #{_sample_impl.1} parent=1 // pred_region
      %154 = dma.done [#allocation9], 2048
    $region69: #{_sample_impl.1} parent=1 // pred_fallthru
      _
    // Predicated region
    $region70: #{_sample_impl.1} parent=1 // pred_check
      _
    $region71: #{_sample_impl.1} parent=1 // pred_check_branch
      %156 = sbr.rel (0) target = $region73
    $region72: #{_sample_impl.1} parent=1 // pred_region
      %157 = dma.done [#allocation9], 32
    $region73: #{_sample_impl.1} parent=1 // pred_fallthru
      _
    // Predicated region
    $region74: #{_sample_impl.1} parent=1 // pred_check
      _
    $region75: #{_sample_impl.1} parent=1 // pred_check_branch
      %159 = sbr.rel (0) target = $region77
    $region76: #{_sample_impl.1} parent=1 // pred_region
      %160 = dma.done [#allocation12], 4096
    $region77: #{_sample_impl.1} parent=1 // pred_fallthru
      _
    // Predicated region
    $region78: #{_sample_impl.1} parent=1 // pred_check
      _
    $region79: #{_sample_impl.1} parent=1 // pred_check_branch
      %162 = sbr.rel (0) target = $region81
    $region80: #{_sample_impl.1} parent=1 // pred_region
      %163 = dma.done [#allocation12], 2048
    $region81: #{_sample_impl.1} parent=1 // pred_fallthru
      _
    // Predicated region
    $region82: #{_sample_impl.1} parent=1 // pred_check
      _
    $region83: #{_sample_impl.1} parent=1 // pred_check_branch
      %165 = sbr.rel (0) target = $region85
    $region84: #{_sample_impl.1} parent=1 // pred_region
      %166 = dma.done [#allocation15], 4096
    $region85: #{_sample_impl.1} parent=1 // pred_fallthru
      _
    // Predicated region
    $region86: #{_sample_impl.1} parent=1 // pred_check
      _
    $region87: #{_sample_impl.1} parent=1 // pred_check_branch
      %168 = sbr.rel (0) target = $region89
    $region88: #{_sample_impl.1} parent=1 // pred_region
      %169 = dma.done [#allocation15], 32
    $region89: #{_sample_impl.1} parent=1 // pred_fallthru
      _
    // Predicated region
    $region90: #{_sample_impl.1} parent=1 // pred_check
      _
    $region91: #{_sample_impl.1} parent=1 // pred_check_branch
      %171 = sbr.rel (0) target = $region93
    $region92: #{_sample_impl.1} parent=1 // pred_region
      %172 = dma.done [#allocation18], 32
    $region93: #{_sample_impl.1} parent=1 // pred_fallthru
      _
    %v174 = vld [vmem:[#allocation2] sm:$0x3f]
    %v175 = vld [vmem:[#allocation5] sm:$0xf]
    %v176 = vld [vmem:[#allocation5 + $0x4] sm:$0xf]
    %v177 = vld [vmem:[#allocation5 + $0x8] sm:$0xf]
    %v178 = vld [vmem:[#allocation5 + $0xc] sm:$0xf]
    %v179 = vld [vmem:[#allocation5 + $0x10] sm:$0xf]
    %v180 = vld [vmem:[#allocation5 + $0x14] sm:$0xf]
    %v181 = vld [vmem:[#allocation5 + $0x18] sm:$0xf]
    %v182 = vld [vmem:[#allocation5 + $0x1c] sm:$0xf]
    %v183 = vld [vmem:[#allocation5 + $0x20] sm:$0xf]
    %v184 = vld [vmem:[#allocation5 + $0x24] sm:$0xf]
    %v185 = vld [vmem:[#allocation5 + $0x28] sm:$0xf]
    %v186 = vld [vmem:[#allocation5 + $0x2c] sm:$0xf]
    %v187 = vld [vmem:[#allocation5 + $0x30] sm:$0xf]
    %v188 = vld [vmem:[#allocation5 + $0x34] sm:$0xf]
    %v189 = vld [vmem:[#allocation5 + $0x38] sm:$0xf]
    %v190 = vld [vmem:[#allocation5 + $0x3c] sm:$0xf]
    %v191 = vld [vmem:[#allocation5 + $0x40] sm:$0xf]
    %v192 = vld [vmem:[#allocation5 + $0x44] sm:$0xf]
    %v193 = vld [vmem:[#allocation5 + $0x48] sm:$0xf]
    %v194 = vld [vmem:[#allocation5 + $0x4c] sm:$0xf]
    %v195 = vld [vmem:[#allocation5 + $0x50] sm:$0xf]
    %v196 = vld [vmem:[#allocation5 + $0x54] sm:$0xf]
    %v197 = vld [vmem:[#allocation5 + $0x58] sm:$0xf]
    %v198 = vld [vmem:[#allocation5 + $0x5c] sm:$0xf]
    %v199 = vld [vmem:[#allocation5 + $0x60] sm:$0xf]
    %v200 = vld [vmem:[#allocation5 + $0x64] sm:$0xf]
    %v201 = vld [vmem:[#allocation5 + $0x68] sm:$0xf]
    %v202 = vld [vmem:[#allocation5 + $0x6c] sm:$0xf]
    %v203 = vld [vmem:[#allocation5 + $0x70] sm:$0xf]
    %v204 = vld [vmem:[#allocation5 + $0x74] sm:$0xf]
    %v205 = vld [vmem:[#allocation5 + $0x78] sm:$0xf]
    %v206 = vld [vmem:[#allocation5 + $0x7c] sm:$0xf]
    %v207 = vld [vmem:[#allocation5 + $0x80] sm:$0xf]
    %v208 = vld [vmem:[#allocation5 + $0x84] sm:$0xf]
    %v209 = vld [vmem:[#allocation5 + $0x88] sm:$0xf]
    %v210 = vld [vmem:[#allocation5 + $0x8c] sm:$0xf]
    %v211 = vld [vmem:[#allocation5 + $0x90] sm:$0xf]
    %v212 = vld [vmem:[#allocation5 + $0x94] sm:$0xf]
    %v213 = vld [vmem:[#allocation5 + $0x98] sm:$0xf]
    %v214 = vld [vmem:[#allocation5 + $0x9c] sm:$0xf]
    %v215 = vld [vmem:[#allocation5 + $0xa0] sm:$0xf]
    %v216 = vld [vmem:[#allocation5 + $0xa4] sm:$0xf]
    %v217 = vld [vmem:[#allocation5 + $0xa8] sm:$0xf]
    %v218 = vld [vmem:[#allocation5 + $0xac] sm:$0xf]
    %v219 = vld [vmem:[#allocation5 + $0xb0] sm:$0xf]
    %v220 = vld [vmem:[#allocation5 + $0xb4] sm:$0xf]
    %v221 = vld [vmem:[#allocation5 + $0xb8] sm:$0xf]
    %v222 = vld [vmem:[#allocation5 + $0xbc] sm:$0xf]
    %v223 = vld [vmem:[#allocation5 + $0xc0] sm:$0xf]
    %v224 = vld [vmem:[#allocation5 + $0xc4] sm:$0xf]
    %v225 = vld [vmem:[#allocation5 + $0xc8] sm:$0xf]
    %v226 = vld [vmem:[#allocation5 + $0xcc] sm:$0xf]
    %v227 = vld [vmem:[#allocation5 + $0xd0] sm:$0xf]
    %v228 = vld [vmem:[#allocation5 + $0xd4] sm:$0xf]
    %v229 = vld [vmem:[#allocation5 + $0xd8] sm:$0xf]
    %v230 = vld [vmem:[#allocation5 + $0xdc] sm:$0xf]
    %v231 = vld [vmem:[#allocation5 + $0xe0] sm:$0xf]
    %v232 = vld [vmem:[#allocation5 + $0xe4] sm:$0xf]
    %v233 = vld [vmem:[#allocation5 + $0xe8] sm:$0xf]
    %v234 = vld [vmem:[#allocation5 + $0xec] sm:$0xf]
    %v235 = vld [vmem:[#allocation5 + $0xf0] sm:$0xf]
    %v236 = vld [vmem:[#allocation5 + $0xf4] sm:$0xf]
    %v237 = vld [vmem:[#allocation5 + $0xf8] sm:$0xf]
    %v238 = vld [vmem:[#allocation5 + $0xfc] sm:$0xf]
    %v239 = vld [vmem:[#allocation5 + $0x100] sm:$0xf]
    %v240 = vld [vmem:[#allocation5 + $0x104] sm:$0xf]
    %v241 = vld [vmem:[#allocation5 + $0x108] sm:$0xf]
    %v242 = vld [vmem:[#allocation5 + $0x10c] sm:$0xf]
    %v243 = vld [vmem:[#allocation5 + $0x110] sm:$0xf]
    %v244 = vld [vmem:[#allocation5 + $0x114] sm:$0xf]
    %v245 = vld [vmem:[#allocation5 + $0x118] sm:$0xf]
    %v246 = vld [vmem:[#allocation5 + $0x11c] sm:$0xf]
    %v247 = vld [vmem:[#allocation5 + $0x120] sm:$0xf]
    %v248 = vld [vmem:[#allocation5 + $0x124] sm:$0xf]
    %v249 = vld [vmem:[#allocation5 + $0x128] sm:$0xf]
    %v250 = vld [vmem:[#allocation5 + $0x12c] sm:$0xf]
    %v251 = vld [vmem:[#allocation5 + $0x130] sm:$0xf]
    %v252 = vld [vmem:[#allocation5 + $0x134] sm:$0xf]
    %v253 = vld [vmem:[#allocation5 + $0x138] sm:$0xf]
    %v254 = vld [vmem:[#allocation5 + $0x13c] sm:$0xf]
    %v255 = vld [vmem:[#allocation5 + $0x140] sm:$0xf]
    %v256 = vld [vmem:[#allocation5 + $0x144] sm:$0xf]
    %v257 = vld [vmem:[#allocation5 + $0x148] sm:$0xf]
    %v258 = vld [vmem:[#allocation5 + $0x14c] sm:$0xf]
    %v259 = vld [vmem:[#allocation5 + $0x150] sm:$0xf]
    %v260 = vld [vmem:[#allocation5 + $0x154] sm:$0xf]
    %v261 = vld [vmem:[#allocation5 + $0x158] sm:$0xf]
    %v262 = vld [vmem:[#allocation5 + $0x15c] sm:$0xf]
    %v263 = vld [vmem:[#allocation5 + $0x160] sm:$0xf]
    %v264 = vld [vmem:[#allocation5 + $0x164] sm:$0xf]
    %v265 = vld [vmem:[#allocation5 + $0x168] sm:$0xf]
    %v266 = vld [vmem:[#allocation5 + $0x16c] sm:$0xf]
    %v267 = vld [vmem:[#allocation5 + $0x170] sm:$0xf]
    %v268 = vld [vmem:[#allocation5 + $0x174] sm:$0xf]
    %v269 = vld [vmem:[#allocation5 + $0x178] sm:$0xf]
    %v270 = vld [vmem:[#allocation5 + $0x17c] sm:$0xf]
    %v271 = vld [vmem:[%s2] sm:$0x1]
    %v273 = vlaneseq
    %v274 = vshrl.u32 %v273, 7
    %v275 = vsub.s32 0, %v274
    %v276 = vrot.slane %v271, %v275
    %v279 = vcombine.high %v174, %v174
    %v281 = vunpack.c.l.s4 1966171168
    %v282 = vunpack.c.0.s8 %v281
    %v283 = vlaneseq
    %v284 = vshrl.u32 %v283, 7
    %v285 = vsub.s32 %v282, %v284
    %v286 = vrot.slane %v174, %v285
    %v288 = vunpack.c.l.s4 1966171168
    %v289 = vunpack.c.0.s8 %v288
    %v290 = vlaneseq
    %v291 = vshrl.u32 %v290, 7
    %v292 = vsub.s32 %v289, %v291
    %v293 = vrot.slane %v279, %v292
    %v294 = vcombine.high %v286, %v286
    %v295 = vcombine.high %v293, %v293
    %v297 = vunpack.c.l.s4 1966171168
    %v298 = vunpack.c.0.s8 %v297
    %v299 = vlaneseq
    %v300 = vshrl.u32 %v299, 7
    %v301 = vsub.s32 %v298, %v300
    %v302 = vrot.slane %v286, %v301
    %v304 = vunpack.c.l.s4 1966171168
    %v305 = vunpack.c.0.s8 %v304
    %v306 = vlaneseq
    %v307 = vshrl.u32 %v306, 7
    %v308 = vsub.s32 %v305, %v307
    %v309 = vrot.slane %v293, %v308
    %v311 = vunpack.c.l.s4 1966171168
    %v312 = vunpack.c.0.s8 %v311
    %v313 = vlaneseq
    %v314 = vshrl.u32 %v313, 7
    %v315 = vsub.s32 %v312, %v314
    %v316 = vrot.slane %v294, %v315
    %v318 = vunpack.c.l.s4 1966171168
    %v319 = vunpack.c.0.s8 %v318
    %v320 = vlaneseq
    %v321 = vshrl.u32 %v320, 7
    %v322 = vsub.s32 %v319, %v321
    %v323 = vrot.slane %v295, %v322
    %v324 = vcombine.high %v302, %v302
    %v325 = vcombine.high %v316, %v316
    %v428 = vunpack.c.l.b16 %v175
    %v429 = vunpack.c.l.b16 %v176
    %v430 = vunpack.c.l.b16 %v177
    %v431 = vunpack.c.l.b16 %v178
    %v432 = vunpack.c.l.b16 %v179
    %v433 = vunpack.c.l.b16 %v180
    %v434 = vunpack.c.l.b16 %v181
    %v435 = vunpack.c.l.b16 %v182
    %v436 = vunpack.c.l.b16 %v183
    %v437 = vunpack.c.l.b16 %v184
    %v438 = vunpack.c.l.b16 %v185
    %v439 = vunpack.c.l.b16 %v186
    %v440 = vunpack.c.l.b16 %v187
    %v441 = vunpack.c.l.b16 %v188
    %v442 = vunpack.c.l.b16 %v189
    %v443 = vunpack.c.l.b16 %v190
    %v444 = vunpack.c.l.b16 %v191
    %v445 = vunpack.c.l.b16 %v192
    %v446 = vunpack.c.l.b16 %v193
    %v447 = vunpack.c.l.b16 %v194
    %v448 = vunpack.c.l.b16 %v195
    %v449 = vunpack.c.l.b16 %v196
    %v450 = vunpack.c.l.b16 %v197
    %v451 = vunpack.c.l.b16 %v198
    %v452 = vunpack.c.l.b16 %v199
    %v453 = vunpack.c.l.b16 %v200
    %v454 = vunpack.c.l.b16 %v201
    %v455 = vunpack.c.l.b16 %v202
    %v456 = vunpack.c.l.b16 %v203
    %v457 = vunpack.c.l.b16 %v204
    %v458 = vunpack.c.l.b16 %v205
    %v459 = vunpack.c.l.b16 %v206
    %v460 = vunpack.c.l.b16 %v207
    %v461 = vunpack.c.l.b16 %v208
    %v462 = vunpack.c.l.b16 %v209
    %v463 = vunpack.c.l.b16 %v210
    %v464 = vunpack.c.l.b16 %v211
    %v465 = vunpack.c.l.b16 %v212
    %v466 = vunpack.c.l.b16 %v213
    %v467 = vunpack.c.l.b16 %v214
    %v468 = vunpack.c.l.b16 %v215
    %v469 = vunpack.c.l.b16 %v216
    %v470 = vunpack.c.l.b16 %v217
    %v471 = vunpack.c.l.b16 %v218
    %v472 = vunpack.c.l.b16 %v219
    %v473 = vunpack.c.l.b16 %v220
    %v474 = vunpack.c.l.b16 %v221
    %v475 = vunpack.c.l.b16 %v222
    %v476 = vunpack.c.l.b16 %v223
    %v477 = vunpack.c.l.b16 %v224
    %v478 = vunpack.c.l.b16 %v225
    %v479 = vunpack.c.l.b16 %v226
    %v480 = vunpack.c.l.b16 %v227
    %v481 = vunpack.c.l.b16 %v228
    %v482 = vunpack.c.l.b16 %v229
    %v483 = vunpack.c.l.b16 %v230
    %v484 = vunpack.c.l.b16 %v231
    %v485 = vunpack.c.l.b16 %v232
    %v486 = vunpack.c.l.b16 %v233
    %v487 = vunpack.c.l.b16 %v234
    %v488 = vunpack.c.l.b16 %v235
    %v489 = vunpack.c.l.b16 %v236
    %v490 = vunpack.c.l.b16 %v237
    %v491 = vunpack.c.l.b16 %v238
    %v492 = vunpack.c.l.b16 %v239
    %v493 = vunpack.c.l.b16 %v240
    %v494 = vunpack.c.l.b16 %v241
    %v495 = vunpack.c.l.b16 %v242
    %v496 = vunpack.c.l.b16 %v243
    %v497 = vunpack.c.l.b16 %v244
    %v498 = vunpack.c.l.b16 %v245
    %v499 = vunpack.c.l.b16 %v246
    %v500 = vunpack.c.l.b16 %v247
    %v501 = vunpack.c.l.b16 %v248
    %v502 = vunpack.c.l.b16 %v249
    %v503 = vunpack.c.l.b16 %v250
    %v504 = vunpack.c.l.b16 %v251
    %v505 = vunpack.c.l.b16 %v252
    %v506 = vunpack.c.l.b16 %v253
    %v507 = vunpack.c.l.b16 %v254
    %v508 = vunpack.c.l.b16 %v255
    %v509 = vunpack.c.l.b16 %v256
    %v510 = vunpack.c.l.b16 %v257
    %v511 = vunpack.c.l.b16 %v258
    %v512 = vunpack.c.l.b16 %v259
    %v513 = vunpack.c.l.b16 %v260
    %v514 = vunpack.c.l.b16 %v261
    %v515 = vunpack.c.l.b16 %v262
    %v516 = vunpack.c.l.b16 %v263
    %v517 = vunpack.c.l.b16 %v264
    %v518 = vunpack.c.l.b16 %v265
    %v519 = vunpack.c.l.b16 %v266
    %v520 = vunpack.c.l.b16 %v267
    %v521 = vunpack.c.l.b16 %v268
    %v522 = vunpack.c.l.b16 %v269
    %v523 = vunpack.c.l.b16 %v270
    %v524 = vpack.c.b16 %v429, %v428
    %v525 = vpack.c.b16 %v431, %v430
    %v526 = vpack.c.b16 %v433, %v432
    %v527 = vpack.c.b16 %v435, %v434
    %v528 = vpack.c.b16 %v437, %v436
    %v529 = vpack.c.b16 %v439, %v438
    %v530 = vpack.c.b16 %v441, %v440
    %v531 = vpack.c.b16 %v443, %v442
    %v532 = vpack.c.b16 %v445, %v444
    %v533 = vpack.c.b16 %v447, %v446
    %v534 = vpack.c.b16 %v449, %v448
    %v535 = vpack.c.b16 %v451, %v450
    %v536 = vpack.c.b16 %v453, %v452
    %v537 = vpack.c.b16 %v455, %v454
    %v538 = vpack.c.b16 %v457, %v456
    %v539 = vpack.c.b16 %v459, %v458
    %v540 = vpack.c.b16 %v461, %v460
    %v541 = vpack.c.b16 %v463, %v462
    %v542 = vpack.c.b16 %v465, %v464
    %v543 = vpack.c.b16 %v467, %v466
    %v544 = vpack.c.b16 %v469, %v468
    %v545 = vpack.c.b16 %v471, %v470
    %v546 = vpack.c.b16 %v473, %v472
    %v547 = vpack.c.b16 %v475, %v474
    %v548 = vpack.c.b16 %v477, %v476
    %v549 = vpack.c.b16 %v479, %v478
    %v550 = vpack.c.b16 %v481, %v480
    %v551 = vpack.c.b16 %v483, %v482
    %v552 = vpack.c.b16 %v485, %v484
    %v553 = vpack.c.b16 %v487, %v486
    %v554 = vpack.c.b16 %v489, %v488
    %v555 = vpack.c.b16 %v491, %v490
    %v556 = vpack.c.b16 %v493, %v492
    %v557 = vpack.c.b16 %v495, %v494
    %v558 = vpack.c.b16 %v497, %v496
    %v559 = vpack.c.b16 %v499, %v498
    %v560 = vpack.c.b16 %v501, %v500
    %v561 = vpack.c.b16 %v503, %v502
    %v562 = vpack.c.b16 %v505, %v504
    %v563 = vpack.c.b16 %v507, %v506
    %v564 = vpack.c.b16 %v509, %v508
    %v565 = vpack.c.b16 %v511, %v510
    %v566 = vpack.c.b16 %v513, %v512
    %v567 = vpack.c.b16 %v515, %v514
    %v568 = vpack.c.b16 %v517, %v516
    %v569 = vpack.c.b16 %v519, %v518
    %v570 = vpack.c.b16 %v521, %v520
    %v571 = vpack.c.b16 %v523, %v522
    %620 = vmatprep.subr.bf16.mxu0 0
    %621 = vmatpush1.bf16.msra.mxu0 %v531
    %622 = vmatprep.subr.bf16.mxu0 0
    %623 = vmatpush1.bf16.msra.mxu0 %v530
    %624 = vmatprep.subr.bf16.mxu0 0
    %625 = vmatpush1.bf16.msra.mxu0 %v529
    %626 = vmatprep.subr.bf16.mxu0 0
    %627 = vmatpush1.bf16.msra.mxu0 %v528
    %628 = vmatprep.subr.bf16.mxu0 0
    %629 = vmatpush1.bf16.msra.mxu0 %v527
    %630 = vmatprep.subr.bf16.mxu0 0
    %631 = vmatpush1.bf16.msra.mxu0 %v526
    %632 = vmatprep.subr.bf16.mxu0 0
    %633 = vmatpush1.bf16.msra.mxu0 %v525
    %634 = vmatprep.subr.bf16.mxu0 0
    %635 = vmatpush1.bf16.msra.mxu0 %v524
    %636 = vmatprep.subr.bf16.mxu0 0
    %637 = vmatpush2.bf16.msra.mxu0 %v539
    %638 = vmatprep.subr.bf16.mxu0 0
    %639 = vmatpush2.bf16.msra.mxu0 %v538
    %640 = vmatprep.subr.bf16.mxu0 0
    %641 = vmatpush2.bf16.msra.mxu0 %v537
    %642 = vmatprep.subr.bf16.mxu0 0
    %643 = vmatpush2.bf16.msra.mxu0 %v536
    %644 = vmatprep.subr.bf16.mxu0 0
    %645 = vmatpush2.bf16.msra.mxu0 %v535
    %646 = vmatprep.subr.bf16.mxu0 0
    %647 = vmatpush2.bf16.msra.mxu0 %v534
    %648 = vmatprep.subr.bf16.mxu0 0
    %649 = vmatpush2.bf16.msra.mxu0 %v533
    %650 = vmatprep.subr.bf16.mxu0 0
    %651 = vmatpush2.bf16.msra.mxu0 %v532
    %652 = vmatprep.mubr.bf16.mxu0 %v316
    %653 = vmatmul.mubr.bf16.gmra.mxu0 %v302
    %v654 = vpop.f32.mrf.mxu0
    %v655 = vadd.f32 %v276, %v654
    %v656 = vpop.f32.mrf.mxu0
    %v657 = vpop.f32.mrf.mxu0
    %v658 = vpop.f32.mrf.mxu0
    %659 = vdwg.mxu0
    %660 = vmatprep.subr.bf16.mxu0 0
    %661 = vmatpush1.bf16.msra.mxu0 %v547
    %662 = vmatprep.subr.bf16.mxu0 0
    %663 = vmatpush1.bf16.msra.mxu0 %v546
    %664 = vmatprep.subr.bf16.mxu0 0
    %665 = vmatpush1.bf16.msra.mxu0 %v545
    %666 = vmatprep.subr.bf16.mxu0 0
    %667 = vmatpush1.bf16.msra.mxu0 %v544
    %668 = vmatprep.subr.bf16.mxu0 0
    %669 = vmatpush1.bf16.msra.mxu0 %v543
    %670 = vmatprep.subr.bf16.mxu0 0
    %671 = vmatpush1.bf16.msra.mxu0 %v542
    %672 = vmatprep.subr.bf16.mxu0 0
    %673 = vmatpush1.bf16.msra.mxu0 %v541
    %674 = vmatprep.subr.bf16.mxu0 0
    %675 = vmatpush1.bf16.msra.mxu0 %v540
    %676 = vmatprep.subr.bf16.mxu0 0
    %677 = vmatpush2.bf16.msra.mxu0 %v555
    %678 = vmatprep.subr.bf16.mxu0 0
    %679 = vmatpush2.bf16.msra.mxu0 %v554
    %680 = vmatprep.subr.bf16.mxu0 0
    %681 = vmatpush2.bf16.msra.mxu0 %v553
    %682 = vmatprep.subr.bf16.mxu0 0
    %683 = vmatpush2.bf16.msra.mxu0 %v552
    %684 = vmatprep.subr.bf16.mxu0 0
    %685 = vmatpush2.bf16.msra.mxu0 %v551
    %686 = vmatprep.subr.bf16.mxu0 0
    %687 = vmatpush2.bf16.msra.mxu0 %v550
    %688 = vmatprep.subr.bf16.mxu0 0
    %689 = vmatpush2.bf16.msra.mxu0 %v549
    %690 = vmatprep.subr.bf16.mxu0 0
    %691 = vmatpush2.bf16.msra.mxu0 %v548
    %692 = vmatprep.mubr.bf16.mxu0 %v325
    %693 = vmatmul.mubr.bf16.gmra.mxu0 %v324
    %v694 = vpop.f32.mrf.mxu0
    %v695 = vadd.f32 %v655, %v694
    %v696 = vpop.f32.mrf.mxu0
    %v697 = vpop.f32.mrf.mxu0
    %v698 = vpop.f32.mrf.mxu0
    %699 = vdwg.mxu0
    %700 = vmatprep.subr.bf16.mxu0 0
    %701 = vmatpush1.bf16.msra.mxu0 %v563
    %702 = vmatprep.subr.bf16.mxu0 0
    %703 = vmatpush1.bf16.msra.mxu0 %v562
    %704 = vmatprep.subr.bf16.mxu0 0
    %705 = vmatpush1.bf16.msra.mxu0 %v561
    %706 = vmatprep.subr.bf16.mxu0 0
    %707 = vmatpush1.bf16.msra.mxu0 %v560
    %708 = vmatprep.subr.bf16.mxu0 0
    %709 = vmatpush1.bf16.msra.mxu0 %v559
    %710 = vmatprep.subr.bf16.mxu0 0
    %711 = vmatpush1.bf16.msra.mxu0 %v558
    %712 = vmatprep.subr.bf16.mxu0 0
    %713 = vmatpush1.bf16.msra.mxu0 %v557
    %714 = vmatprep.subr.bf16.mxu0 0
    %715 = vmatpush1.bf16.msra.mxu0 %v556
    %716 = vmatprep.subr.bf16.mxu0 0
    %717 = vmatpush2.bf16.msra.mxu0 %v571
    %718 = vmatprep.subr.bf16.mxu0 0
    %719 = vmatpush2.bf16.msra.mxu0 %v570
    %720 = vmatprep.subr.bf16.mxu0 0
    %721 = vmatpush2.bf16.msra.mxu0 %v569
    %722 = vmatprep.subr.bf16.mxu0 0
    %723 = vmatpush2.bf16.msra.mxu0 %v568
    %724 = vmatprep.subr.bf16.mxu0 0
    %725 = vmatpush2.bf16.msra.mxu0 %v567
    %726 = vmatprep.subr.bf16.mxu0 0
    %727 = vmatpush2.bf16.msra.mxu0 %v566
    %728 = vmatprep.subr.bf16.mxu0 0
    %729 = vmatpush2.bf16.msra.mxu0 %v565
    %730 = vmatprep.subr.bf16.mxu0 0
    %731 = vmatpush2.bf16.msra.mxu0 %v564
    %732 = vmatprep.mubr.bf16.mxu0 %v323
    %733 = vmatmul.mubr.bf16.gmra.mxu0 %v309
    %v734 = vpop.f32.mrf.mxu0
    %v735 = vadd.f32 %v695, %v734
    %v736 = vpop.f32.mrf.mxu0
    %v737 = vpop.f32.mrf.mxu0
    %v738 = vpop.f32.mrf.mxu0
    %739 = vdwg.mxu0
    %v740 = vtanh.pop %v735
    %v741 = vpack.c.bf16 %v740, %v740
    %v742 = vld [vmem:[#allocation7] sm:$0xff]
    %v743 = vld [vmem:[#allocation7 + $0x8] sm:$0xff]
    %v744 = vld [vmem:[#allocation7 + $0x10] sm:$0xff]
    %v745 = vld [vmem:[#allocation7 + $0x18] sm:$0xff]
    %v746 = vld [vmem:[#allocation7 + $0x20] sm:$0xff]
    %v747 = vld [vmem:[#allocation7 + $0x28] sm:$0xff]
    %v748 = vld [vmem:[#allocation7 + $0x30] sm:$0xff]
    %v749 = vld [vmem:[#allocation7 + $0x38] sm:$0xff]
    %v750 = vld [vmem:[#allocation7 + $0x40] sm:$0xff]
    %v751 = vld [vmem:[#allocation7 + $0x48] sm:$0xff]
    %v752 = vld [vmem:[#allocation7 + $0x50] sm:$0xff]
    %v753 = vld [vmem:[#allocation7 + $0x58] sm:$0xff]
    %v754 = vld [vmem:[#allocation7 + $0x60] sm:$0xff]
    %v755 = vld [vmem:[#allocation7 + $0x68] sm:$0xff]
    %v756 = vld [vmem:[#allocation7 + $0x70] sm:$0xff]
    %v757 = vld [vmem:[#allocation7 + $0x78] sm:$0xff]
    %v758 = vld [vmem:[#allocation8] sm:$0xff]
    %v759 = vld [vmem:[#allocation8 + $0x8] sm:$0xff]
    %v760 = vld [vmem:[#allocation8 + $0x10] sm:$0xff]
    %v761 = vld [vmem:[#allocation8 + $0x18] sm:$0xff]
    %v762 = vld [vmem:[#allocation8 + $0x20] sm:$0xff]
    %v763 = vld [vmem:[#allocation8 + $0x28] sm:$0xff]
    %v764 = vld [vmem:[#allocation8 + $0x30] sm:$0xff]
    %v765 = vld [vmem:[#allocation8 + $0x38] sm:$0xff]
    %v766 = vld [vmem:[#allocation8 + $0x40] sm:$0xff]
    %v767 = vld [vmem:[#allocation8 + $0x48] sm:$0xff]
    %v768 = vld [vmem:[#allocation8 + $0x50] sm:$0xff]
    %v769 = vld [vmem:[#allocation8 + $0x58] sm:$0xff]
    %v770 = vld [vmem:[#allocation8 + $0x60] sm:$0xff]
    %v771 = vld [vmem:[#allocation8 + $0x68] sm:$0xff]
    %v772 = vld [vmem:[#allocation8 + $0x70] sm:$0xff]
    %v773 = vld [vmem:[#allocation8 + $0x78] sm:$0xff]
    %v775 = vshrl.u32 %v741, 16
    %v794 = vunpack.c.l.b16 %v758
    %v795 = vunpack.c.h.b16 %v758
    %v796 = vunpack.c.l.b16 %v759
    %v797 = vunpack.c.h.b16 %v759
    %v798 = vunpack.c.l.b16 %v760
    %v799 = vunpack.c.h.b16 %v760
    %v800 = vunpack.c.l.b16 %v761
    %v801 = vunpack.c.h.b16 %v761
    %v802 = vunpack.c.l.b16 %v762
    %v803 = vunpack.c.h.b16 %v762
    %v804 = vunpack.c.l.b16 %v763
    %v805 = vunpack.c.h.b16 %v763
    %v806 = vunpack.c.l.b16 %v764
    %v807 = vunpack.c.h.b16 %v764
    %v808 = vunpack.c.l.b16 %v765
    %v809 = vunpack.c.h.b16 %v765
    %v810 = vunpack.c.l.b16 %v766
    %v811 = vunpack.c.h.b16 %v766
    %v812 = vunpack.c.l.b16 %v767
    %v813 = vunpack.c.h.b16 %v767
    %v814 = vunpack.c.l.b16 %v768
    %v815 = vunpack.c.h.b16 %v768
    %v816 = vunpack.c.l.b16 %v769
    %v817 = vunpack.c.h.b16 %v769
    %v818 = vunpack.c.l.b16 %v770
    %v819 = vunpack.c.h.b16 %v770
    %v820 = vunpack.c.l.b16 %v771
    %v821 = vunpack.c.h.b16 %v771
    %v822 = vunpack.c.l.b16 %v772
    %v823 = vunpack.c.h.b16 %v772
    %v824 = vunpack.c.l.b16 %v773
    %v825 = vunpack.c.h.b16 %v773
    %v826 = vpack.c.b16 %v796, %v794
    %v827 = vpack.c.b16 %v797, %v795
    %v828 = vpack.c.b16 %v800, %v798
    %v829 = vpack.c.b16 %v801, %v799
    %v830 = vpack.c.b16 %v804, %v802
    %v831 = vpack.c.b16 %v805, %v803
    %v832 = vpack.c.b16 %v808, %v806
    %v833 = vpack.c.b16 %v809, %v807
    %v834 = vpack.c.b16 %v812, %v810
    %v835 = vpack.c.b16 %v813, %v811
    %v836 = vpack.c.b16 %v816, %v814
    %v837 = vpack.c.b16 %v817, %v815
    %v838 = vpack.c.b16 %v820, %v818
    %v839 = vpack.c.b16 %v821, %v819
    %v840 = vpack.c.b16 %v824, %v822
    %v841 = vpack.c.b16 %v825, %v823
    %858 = vmatprep.subr.bf16.mxu0 %v841
    %859 = vmatpush1.bf16.msra.mxu0 %v840
    %860 = vmatprep.subr.bf16.mxu0 %v839
    %861 = vmatpush1.bf16.msra.mxu0 %v838
    %862 = vmatprep.subr.bf16.mxu0 %v837
    %863 = vmatpush1.bf16.msra.mxu0 %v836
    %864 = vmatprep.subr.bf16.mxu0 %v835
    %865 = vmatpush1.bf16.msra.mxu0 %v834
    %866 = vmatprep.subr.bf16.mxu0 %v833
    %867 = vmatpush1.bf16.msra.mxu0 %v832
    %868 = vmatprep.subr.bf16.mxu0 %v831
    %869 = vmatpush1.bf16.msra.mxu0 %v830
    %870 = vmatprep.subr.bf16.mxu0 %v829
    %871 = vmatpush1.bf16.msra.mxu0 %v828
    %872 = vmatprep.subr.bf16.mxu0 %v827
    %873 = vmatpush1.bf16.msra.mxu0 %v826
    %874 = vmatprep.subr.bf16.mxu0 0
    %875 = vmatpush2.bf16.msra.mxu0 0
    %876 = vmatprep.subr.bf16.mxu0 0
    %877 = vmatpush2.bf16.msra.mxu0 0
    %878 = vmatprep.subr.bf16.mxu0 0
    %879 = vmatpush2.bf16.msra.mxu0 0
    %880 = vmatprep.subr.bf16.mxu0 0
    %881 = vmatpush2.bf16.msra.mxu0 0
    %882 = vmatprep.subr.bf16.mxu0 0
    %883 = vmatpush2.bf16.msra.mxu0 0
    %884 = vmatprep.subr.bf16.mxu0 0
    %885 = vmatpush2.bf16.msra.mxu0 0
    %886 = vmatprep.subr.bf16.mxu0 0
    %887 = vmatpush2.bf16.msra.mxu0 0
    %888 = vmatprep.subr.bf16.mxu0 0
    %889 = vmatpush2.bf16.msra.mxu0 0
    %890 = vmatprep.mubr.bf16.mxu0 0
    %891 = vmatmul.mubr.bf16.gmra.mxu0 %v775
    %v892 = vpop.f32.mrf.mxu0
    %v893 = vadd.f32 0.0, %v892
    %v894 = vpop.f32.mrf.mxu0
    %v895 = vadd.f32 0.0, %v894
    %v896 = vpop.f32.mrf.mxu0
    %v897 = vpop.f32.mrf.mxu0
    %898 = vdwg.mxu0
    %v915 = vunpack.c.l.b16 %v742
    %v916 = vunpack.c.h.b16 %v742
    %v917 = vunpack.c.l.b16 %v743
    %v918 = vunpack.c.h.b16 %v743
    %v919 = vunpack.c.l.b16 %v744
    %v920 = vunpack.c.h.b16 %v744
    %v921 = vunpack.c.l.b16 %v745
    %v922 = vunpack.c.h.b16 %v745
    %v923 = vunpack.c.l.b16 %v746
    %v924 = vunpack.c.h.b16 %v746
    %v925 = vunpack.c.l.b16 %v747
    %v926 = vunpack.c.h.b16 %v747
    %v927 = vunpack.c.l.b16 %v748
    %v928 = vunpack.c.h.b16 %v748
    %v929 = vunpack.c.l.b16 %v749
    %v930 = vunpack.c.h.b16 %v749
    %v931 = vunpack.c.l.b16 %v750
    %v932 = vunpack.c.h.b16 %v750
    %v933 = vunpack.c.l.b16 %v751
    %v934 = vunpack.c.h.b16 %v751
    %v935 = vunpack.c.l.b16 %v752
    %v936 = vunpack.c.h.b16 %v752
    %v937 = vunpack.c.l.b16 %v753
    %v938 = vunpack.c.h.b16 %v753
    %v939 = vunpack.c.l.b16 %v754
    %v940 = vunpack.c.h.b16 %v754
    %v941 = vunpack.c.l.b16 %v755
    %v942 = vunpack.c.h.b16 %v755
    %v943 = vunpack.c.l.b16 %v756
    %v944 = vunpack.c.h.b16 %v756
    %v945 = vunpack.c.l.b16 %v757
    %v946 = vunpack.c.h.b16 %v757
    %v947 = vpack.c.b16 %v917, %v915
    %v948 = vpack.c.b16 %v918, %v916
    %v949 = vpack.c.b16 %v921, %v919
    %v950 = vpack.c.b16 %v922, %v920
    %v951 = vpack.c.b16 %v925, %v923
    %v952 = vpack.c.b16 %v926, %v924
    %v953 = vpack.c.b16 %v929, %v927
    %v954 = vpack.c.b16 %v930, %v928
    %v955 = vpack.c.b16 %v933, %v931
    %v956 = vpack.c.b16 %v934, %v932
    %v957 = vpack.c.b16 %v937, %v935
    %v958 = vpack.c.b16 %v938, %v936
    %v959 = vpack.c.b16 %v941, %v939
    %v960 = vpack.c.b16 %v942, %v940
    %v961 = vpack.c.b16 %v945, %v943
    %v962 = vpack.c.b16 %v946, %v944
    %979 = vmatprep.subr.bf16.mxu0 %v962
    %980 = vmatpush1.bf16.msra.mxu0 %v961
    %981 = vmatprep.subr.bf16.mxu0 %v960
    %982 = vmatpush1.bf16.msra.mxu0 %v959
    %983 = vmatprep.subr.bf16.mxu0 %v958
    %984 = vmatpush1.bf16.msra.mxu0 %v957
    %985 = vmatprep.subr.bf16.mxu0 %v956
    %986 = vmatpush1.bf16.msra.mxu0 %v955
    %987 = vmatprep.subr.bf16.mxu0 %v954
    %988 = vmatpush1.bf16.msra.mxu0 %v953
    %989 = vmatprep.subr.bf16.mxu0 %v952
    %990 = vmatpush1.bf16.msra.mxu0 %v951
    %991 = vmatprep.subr.bf16.mxu0 %v950
    %992 = vmatpush1.bf16.msra.mxu0 %v949
    %993 = vmatprep.subr.bf16.mxu0 %v948
    %994 = vmatpush1.bf16.msra.mxu0 %v947
    %995 = vmatprep.subr.bf16.mxu0 0
    %996 = vmatpush2.bf16.msra.mxu0 0
    %997 = vmatprep.subr.bf16.mxu0 0
    %998 = vmatpush2.bf16.msra.mxu0 0
    %999 = vmatprep.subr.bf16.mxu0 0
    %1000 = vmatpush2.bf16.msra.mxu0 0
    %1001 = vmatprep.subr.bf16.mxu0 0
    %1002 = vmatpush2.bf16.msra.mxu0 0
    %1003 = vmatprep.subr.bf16.mxu0 0
    %1004 = vmatpush2.bf16.msra.mxu0 0
    %1005 = vmatprep.subr.bf16.mxu0 0
    %1006 = vmatpush2.bf16.msra.mxu0 0
    %1007 = vmatprep.subr.bf16.mxu0 0
    %1008 = vmatpush2.bf16.msra.mxu0 0
    %1009 = vmatprep.subr.bf16.mxu0 0
    %1010 = vmatpush2.bf16.msra.mxu0 0
    %1011 = vmatprep.mubr.bf16.mxu0 0
    %1012 = vmatmul.mubr.bf16.gmra.mxu0 %v741
    %v1013 = vpop.f32.mrf.mxu0
    %v1014 = vadd.f32 %v893, %v1013
    %v1015 = vpop.f32.mrf.mxu0
    %v1016 = vadd.f32 %v895, %v1015
    %v1017 = vpop.f32.mrf.mxu0
    %v1018 = vpop.f32.mrf.mxu0
    %1019 = vdwg.mxu0
    %v1020 = vld [vmem:[%s10] sm:$0xf]
    %v1021 = vld [vmem:[#allocation13] sm:$0xff]
    %v1022 = vld [vmem:[#allocation13 + $0x8] sm:$0xff]
    %v1023 = vld [vmem:[#allocation13 + $0x10] sm:$0xff]
    %v1024 = vld [vmem:[#allocation13 + $0x18] sm:$0xff]
    %v1025 = vld [vmem:[#allocation13 + $0x20] sm:$0xff]
    %v1026 = vld [vmem:[#allocation13 + $0x28] sm:$0xff]
    %v1027 = vld [vmem:[#allocation13 + $0x30] sm:$0xff]
    %v1028 = vld [vmem:[#allocation13 + $0x38] sm:$0xff]
    %v1029 = vld [vmem:[#allocation13 + $0x40] sm:$0xff]
    %v1030 = vld [vmem:[#allocation13 + $0x48] sm:$0xff]
    %v1031 = vld [vmem:[#allocation13 + $0x50] sm:$0xff]
    %v1032 = vld [vmem:[#allocation13 + $0x58] sm:$0xff]
    %v1033 = vld [vmem:[#allocation13 + $0x60] sm:$0xff]
    %v1034 = vld [vmem:[#allocation13 + $0x68] sm:$0xff]
    %v1035 = vld [vmem:[#allocation13 + $0x70] sm:$0xff]
    %v1036 = vld [vmem:[#allocation13 + $0x78] sm:$0xff]
    %v1037 = vld [vmem:[#allocation10] sm:$0x3]
    %v1039 = vlaneseq
    %v1040 = vshrl.u32 %v1039, 7
    %v1041 = vsub.s32 0, %v1040
    %v1042 = vrot.slane %v1037, %v1041
    %v1043 = vlaneseq
    %v1044 = vshrl.u32 %v1043, 7
    %v1045 = vsub.s32 1, %v1044
    %v1046 = vrot.slane %v1037, %v1045
    %v1065 = vunpack.c.l.b16 %v1021
    %v1066 = vunpack.c.h.b16 %v1021
    %v1067 = vunpack.c.l.b16 %v1022
    %v1068 = vunpack.c.h.b16 %v1022
    %v1069 = vunpack.c.l.b16 %v1023
    %v1070 = vunpack.c.h.b16 %v1023
    %v1071 = vunpack.c.l.b16 %v1024
    %v1072 = vunpack.c.h.b16 %v1024
    %v1073 = vunpack.c.l.b16 %v1025
    %v1074 = vunpack.c.h.b16 %v1025
    %v1075 = vunpack.c.l.b16 %v1026
    %v1076 = vunpack.c.h.b16 %v1026
    %v1077 = vunpack.c.l.b16 %v1027
    %v1078 = vunpack.c.h.b16 %v1027
    %v1079 = vunpack.c.l.b16 %v1028
    %v1080 = vunpack.c.h.b16 %v1028
    %v1081 = vunpack.c.l.b16 %v1029
    %v1082 = vunpack.c.h.b16 %v1029
    %v1083 = vunpack.c.l.b16 %v1030
    %v1084 = vunpack.c.h.b16 %v1030
    %v1085 = vunpack.c.l.b16 %v1031
    %v1086 = vunpack.c.h.b16 %v1031
    %v1087 = vunpack.c.l.b16 %v1032
    %v1088 = vunpack.c.h.b16 %v1032
    %v1089 = vunpack.c.l.b16 %v1033
    %v1090 = vunpack.c.h.b16 %v1033
    %v1091 = vunpack.c.l.b16 %v1034
    %v1092 = vunpack.c.h.b16 %v1034
    %v1093 = vunpack.c.l.b16 %v1035
    %v1094 = vunpack.c.h.b16 %v1035
    %v1095 = vunpack.c.l.b16 %v1036
    %v1096 = vunpack.c.h.b16 %v1036
    %v1097 = vpack.c.b16 %v1067, %v1065
    %v1098 = vpack.c.b16 %v1068, %v1066
    %v1099 = vpack.c.b16 %v1071, %v1069
    %v1100 = vpack.c.b16 %v1072, %v1070
    %v1101 = vpack.c.b16 %v1075, %v1073
    %v1102 = vpack.c.b16 %v1076, %v1074
    %v1103 = vpack.c.b16 %v1079, %v1077
    %v1104 = vpack.c.b16 %v1080, %v1078
    %v1105 = vpack.c.b16 %v1083, %v1081
    %v1106 = vpack.c.b16 %v1084, %v1082
    %v1107 = vpack.c.b16 %v1087, %v1085
    %v1108 = vpack.c.b16 %v1088, %v1086
    %v1109 = vpack.c.b16 %v1091, %v1089
    %v1110 = vpack.c.b16 %v1092, %v1090
    %v1111 = vpack.c.b16 %v1095, %v1093
    %v1112 = vpack.c.b16 %v1096, %v1094
    %1129 = vmatprep.subr.bf16.mxu0 %v1112
    %1130 = vmatpush1.bf16.msra.mxu0 %v1111
    %1131 = vmatprep.subr.bf16.mxu0 %v1110
    %1132 = vmatpush1.bf16.msra.mxu0 %v1109
    %1133 = vmatprep.subr.bf16.mxu0 %v1108
    %1134 = vmatpush1.bf16.msra.mxu0 %v1107
    %1135 = vmatprep.subr.bf16.mxu0 %v1106
    %1136 = vmatpush1.bf16.msra.mxu0 %v1105
    %1137 = vmatprep.subr.bf16.mxu0 %v1104
    %1138 = vmatpush1.bf16.msra.mxu0 %v1103
    %1139 = vmatprep.subr.bf16.mxu0 %v1102
    %1140 = vmatpush1.bf16.msra.mxu0 %v1101
    %1141 = vmatprep.subr.bf16.mxu0 %v1100
    %1142 = vmatpush1.bf16.msra.mxu0 %v1099
    %1143 = vmatprep.subr.bf16.mxu0 %v1098
    %1144 = vmatpush1.bf16.msra.mxu0 %v1097
    %1145 = vmatprep.subr.bf16.mxu0 0
    %1146 = vmatpush2.bf16.msra.mxu0 0
    %1147 = vmatprep.subr.bf16.mxu0 0
    %1148 = vmatpush2.bf16.msra.mxu0 0
    %1149 = vmatprep.subr.bf16.mxu0 0
    %1150 = vmatpush2.bf16.msra.mxu0 0
    %1151 = vmatprep.subr.bf16.mxu0 0
    %1152 = vmatpush2.bf16.msra.mxu0 0
    %1153 = vmatprep.subr.bf16.mxu0 0
    %1154 = vmatpush2.bf16.msra.mxu0 0
    %1155 = vmatprep.subr.bf16.mxu0 0
    %1156 = vmatpush2.bf16.msra.mxu0 0
    %1157 = vmatprep.subr.bf16.mxu0 0
    %1158 = vmatpush2.bf16.msra.mxu0 0
    %1159 = vmatprep.subr.bf16.mxu0 0
    %1160 = vmatpush2.bf16.msra.mxu0 0
    %1161 = vmatprep.mubr.bf16.mxu0 0
    %1162 = vmatmul.mubr.bf16.gmra.mxu0 %v1020
    %v1163 = vpop.f32.mrf.mxu0
    %v1164 = vadd.f32 %v1042, %v1163
    %v1165 = vpop.f32.mrf.mxu0
    %v1166 = vadd.f32 %v1046, %v1165
    %v1167 = vpop.f32.mrf.mxu0
    %v1168 = vpop.f32.mrf.mxu0
    %1169 = vdwg.mxu0
    %v1170 = vlaneseq
    %v1171 = vshrl.u32 %v1170, 7
    %v1172 = vsub.s32 0, %v1171
    %v1173 = vrot.slane %v1014, %v1172
    %v1174 = vlaneseq
    %v1175 = vshrl.u32 %v1174, 7
    %v1176 = vsub.s32 0, %v1175
    %v1177 = vrot.slane %v1016, %v1176
    %v1178 = vadd.f32 %v1164, %v1173
    %v1179 = vadd.f32 %v1166, %v1177
    %v1180 = vld [vmem:[#allocation17] sm:$0x3]
    %v1182 = vlaneseq
    %v1183 = vshrl.u32 %v1182, 7
    %v1184 = vsub.s32 0, %v1183
    %v1185 = vrot.slane %v1180, %v1184
    %v1186 = vlaneseq
    %v1187 = vshrl.u32 %v1186, 7
    %v1188 = vsub.s32 1, %v1187
    %v1189 = vrot.slane %v1180, %v1188
    %v1192 = vpack.c.bf16 %v1185, %v1185
    %v1193 = vpack.c.bf16 %v1189, %v1189
    %v1194 = vld [vmem:[#allocation11] sm:$0xff]
    %v1195 = vld [vmem:[#allocation11 + $0x8] sm:$0xff]
    %v1196 = vld [vmem:[#allocation11 + $0x10] sm:$0xff]
    %v1197 = vld [vmem:[#allocation11 + $0x18] sm:$0xff]
    %v1198 = vld [vmem:[#allocation11 + $0x20] sm:$0xff]
    %v1199 = vld [vmem:[#allocation11 + $0x28] sm:$0xff]
    %v1200 = vld [vmem:[#allocation11 + $0x30] sm:$0xff]
    %v1201 = vld [vmem:[#allocation11 + $0x38] sm:$0xff]
    %v1202 = vld [vmem:[#allocation11 + $0x40] sm:$0xff]
    %v1203 = vld [vmem:[#allocation11 + $0x48] sm:$0xff]
    %v1204 = vld [vmem:[#allocation11 + $0x50] sm:$0xff]
    %v1205 = vld [vmem:[#allocation11 + $0x58] sm:$0xff]
    %v1206 = vld [vmem:[#allocation11 + $0x60] sm:$0xff]
    %v1207 = vld [vmem:[#allocation11 + $0x68] sm:$0xff]
    %v1208 = vld [vmem:[#allocation11 + $0x70] sm:$0xff]
    %v1209 = vld [vmem:[#allocation11 + $0x78] sm:$0xff]
    %v1210 = vld [vmem:[#allocation11 + $0x80] sm:$0xff]
    %v1211 = vld [vmem:[#allocation11 + $0x88] sm:$0xff]
    %v1212 = vld [vmem:[#allocation11 + $0x90] sm:$0xff]
    %v1213 = vld [vmem:[#allocation11 + $0x98] sm:$0xff]
    %v1214 = vld [vmem:[#allocation11 + $0xa0] sm:$0xff]
    %v1215 = vld [vmem:[#allocation11 + $0xa8] sm:$0xff]
    %v1216 = vld [vmem:[#allocation11 + $0xb0] sm:$0xff]
    %v1217 = vld [vmem:[#allocation11 + $0xb8] sm:$0xff]
    %v1218 = vld [vmem:[#allocation11 + $0xc0] sm:$0xff]
    %v1219 = vld [vmem:[#allocation11 + $0xc8] sm:$0xff]
    %v1220 = vld [vmem:[#allocation11 + $0xd0] sm:$0xff]
    %v1221 = vld [vmem:[#allocation11 + $0xd8] sm:$0xff]
    %v1222 = vld [vmem:[#allocation11 + $0xe0] sm:$0xff]
    %v1223 = vld [vmem:[#allocation11 + $0xe8] sm:$0xff]
    %v1224 = vld [vmem:[#allocation11 + $0xf0] sm:$0xff]
    %v1225 = vld [vmem:[#allocation11 + $0xf8] sm:$0xff]
    %v1258 = vunpack.c.l.b16 %v1194
    %v1259 = vunpack.c.h.b16 %v1194
    %v1260 = vunpack.c.l.b16 %v1195
    %v1261 = vunpack.c.h.b16 %v1195
    %v1262 = vunpack.c.l.b16 %v1196
    %v1263 = vunpack.c.h.b16 %v1196
    %v1264 = vunpack.c.l.b16 %v1197
    %v1265 = vunpack.c.h.b16 %v1197
    %v1266 = vunpack.c.l.b16 %v1198
    %v1267 = vunpack.c.h.b16 %v1198
    %v1268 = vunpack.c.l.b16 %v1199
    %v1269 = vunpack.c.h.b16 %v1199
    %v1270 = vunpack.c.l.b16 %v1200
    %v1271 = vunpack.c.h.b16 %v1200
    %v1272 = vunpack.c.l.b16 %v1201
    %v1273 = vunpack.c.h.b16 %v1201
    %v1274 = vunpack.c.l.b16 %v1202
    %v1275 = vunpack.c.h.b16 %v1202
    %v1276 = vunpack.c.l.b16 %v1203
    %v1277 = vunpack.c.h.b16 %v1203
    %v1278 = vunpack.c.l.b16 %v1204
    %v1279 = vunpack.c.h.b16 %v1204
    %v1280 = vunpack.c.l.b16 %v1205
    %v1281 = vunpack.c.h.b16 %v1205
    %v1282 = vunpack.c.l.b16 %v1206
    %v1283 = vunpack.c.h.b16 %v1206
    %v1284 = vunpack.c.l.b16 %v1207
    %v1285 = vunpack.c.h.b16 %v1207
    %v1286 = vunpack.c.l.b16 %v1208
    %v1287 = vunpack.c.h.b16 %v1208
    %v1288 = vunpack.c.l.b16 %v1209
    %v1289 = vunpack.c.h.b16 %v1209
    %v1290 = vunpack.c.l.b16 %v1210
    %v1291 = vunpack.c.h.b16 %v1210
    %v1292 = vunpack.c.l.b16 %v1211
    %v1293 = vunpack.c.h.b16 %v1211
    %v1294 = vunpack.c.l.b16 %v1212
    %v1295 = vunpack.c.h.b16 %v1212
    %v1296 = vunpack.c.l.b16 %v1213
    %v1297 = vunpack.c.h.b16 %v1213
    %v1298 = vunpack.c.l.b16 %v1214
    %v1299 = vunpack.c.h.b16 %v1214
    %v1300 = vunpack.c.l.b16 %v1215
    %v1301 = vunpack.c.h.b16 %v1215
    %v1302 = vunpack.c.l.b16 %v1216
    %v1303 = vunpack.c.h.b16 %v1216
    %v1304 = vunpack.c.l.b16 %v1217
    %v1305 = vunpack.c.h.b16 %v1217
    %v1306 = vunpack.c.l.b16 %v1218
    %v1307 = vunpack.c.h.b16 %v1218
    %v1308 = vunpack.c.l.b16 %v1219
    %v1309 = vunpack.c.h.b16 %v1219
    %v1310 = vunpack.c.l.b16 %v1220
    %v1311 = vunpack.c.h.b16 %v1220
    %v1312 = vunpack.c.l.b16 %v1221
    %v1313 = vunpack.c.h.b16 %v1221
    %v1314 = vunpack.c.l.b16 %v1222
    %v1315 = vunpack.c.h.b16 %v1222
    %v1316 = vunpack.c.l.b16 %v1223
    %v1317 = vunpack.c.h.b16 %v1223
    %v1318 = vunpack.c.l.b16 %v1224
    %v1319 = vunpack.c.h.b16 %v1224
    %v1320 = vunpack.c.l.b16 %v1225
    %v1321 = vunpack.c.h.b16 %v1225
    %v1322 = vpack.c.b16 %v1260, %v1258
    %v1323 = vpack.c.b16 %v1261, %v1259
    %v1324 = vpack.c.b16 %v1264, %v1262
    %v1325 = vpack.c.b16 %v1265, %v1263
    %v1326 = vpack.c.b16 %v1268, %v1266
    %v1327 = vpack.c.b16 %v1269, %v1267
    %v1328 = vpack.c.b16 %v1272, %v1270
    %v1329 = vpack.c.b16 %v1273, %v1271
    %v1330 = vpack.c.b16 %v1276, %v1274
    %v1331 = vpack.c.b16 %v1277, %v1275
    %v1332 = vpack.c.b16 %v1280, %v1278
    %v1333 = vpack.c.b16 %v1281, %v1279
    %v1334 = vpack.c.b16 %v1284, %v1282
    %v1335 = vpack.c.b16 %v1285, %v1283
    %v1336 = vpack.c.b16 %v1288, %v1286
    %v1337 = vpack.c.b16 %v1289, %v1287
    %v1338 = vpack.c.b16 %v1292, %v1290
    %v1339 = vpack.c.b16 %v1293, %v1291
    %v1340 = vpack.c.b16 %v1296, %v1294
    %v1341 = vpack.c.b16 %v1297, %v1295
    %v1342 = vpack.c.b16 %v1300, %v1298
    %v1343 = vpack.c.b16 %v1301, %v1299
    %v1344 = vpack.c.b16 %v1304, %v1302
    %v1345 = vpack.c.b16 %v1305, %v1303
    %v1346 = vpack.c.b16 %v1308, %v1306
    %v1347 = vpack.c.b16 %v1309, %v1307
    %v1348 = vpack.c.b16 %v1312, %v1310
    %v1349 = vpack.c.b16 %v1313, %v1311
    %v1350 = vpack.c.b16 %v1316, %v1314
    %v1351 = vpack.c.b16 %v1317, %v1315
    %v1352 = vpack.c.b16 %v1320, %v1318
    %v1353 = vpack.c.b16 %v1321, %v1319
    %1386 = vmatprep.subr.bf16.mxu0 %v1337
    %1387 = vmatpush1.bf16.msra.mxu0 %v1336
    %1388 = vmatprep.subr.bf16.mxu0 %v1335
    %1389 = vmatpush1.bf16.msra.mxu0 %v1334
    %1390 = vmatprep.subr.bf16.mxu0 %v1333
    %1391 = vmatpush1.bf16.msra.mxu0 %v1332
    %1392 = vmatprep.subr.bf16.mxu0 %v1331
    %1393 = vmatpush1.bf16.msra.mxu0 %v1330
    %1394 = vmatprep.subr.bf16.mxu0 %v1329
    %1395 = vmatpush1.bf16.msra.mxu0 %v1328
    %1396 = vmatprep.subr.bf16.mxu0 %v1327
    %1397 = vmatpush1.bf16.msra.mxu0 %v1326
    %1398 = vmatprep.subr.bf16.mxu0 %v1325
    %1399 = vmatpush1.bf16.msra.mxu0 %v1324
    %1400 = vmatprep.subr.bf16.mxu0 %v1323
    %1401 = vmatpush1.bf16.msra.mxu0 %v1322
    %1402 = vmatprep.subr.bf16.mxu0 %v1353
    %1403 = vmatpush2.bf16.msra.mxu0 %v1352
    %1404 = vmatprep.subr.bf16.mxu0 %v1351
    %1405 = vmatpush2.bf16.msra.mxu0 %v1350
    %1406 = vmatprep.subr.bf16.mxu0 %v1349
    %1407 = vmatpush2.bf16.msra.mxu0 %v1348
    %1408 = vmatprep.subr.bf16.mxu0 %v1347
    %1409 = vmatpush2.bf16.msra.mxu0 %v1346
    %1410 = vmatprep.subr.bf16.mxu0 %v1345
    %1411 = vmatpush2.bf16.msra.mxu0 %v1344
    %1412 = vmatprep.subr.bf16.mxu0 %v1343
    %1413 = vmatpush2.bf16.msra.mxu0 %v1342
    %1414 = vmatprep.subr.bf16.mxu0 %v1341
    %1415 = vmatpush2.bf16.msra.mxu0 %v1340
    %1416 = vmatprep.subr.bf16.mxu0 %v1339
    %1417 = vmatpush2.bf16.msra.mxu0 %v1338
    %1418 = vmatprep.mubr.bf16.mxu0 %v1193
    %1419 = vmatmul.mubr.bf16.gmra.mxu0 %v1192
    %v1420 = vpop.f32.mrf.mxu0
    %v1421 = vadd.f32 %v1178, %v1420
    %v1422 = vpop.f32.mrf.mxu0
    %v1423 = vadd.f32 %v1179, %v1422
    %v1424 = vpop.f32.mrf.mxu0
    %v1425 = vpop.f32.mrf.mxu0
    %1426 = vdwg.mxu0
    %v1427 = vmax.f32 %v1421, 0.0
    %v1428 = vmax.f32 %v1423, 0.0
    %v1429 = vpack.c.bf16 %v1427, %v1427
    %v1430 = vpack.c.bf16 %v1428, %v1428
    %v1431 = vld [vmem:[#allocation14] sm:$0xff]
    %v1432 = vld [vmem:[#allocation14 + $0x8] sm:$0xff]
    %v1433 = vld [vmem:[#allocation14 + $0x10] sm:$0xff]
    %v1434 = vld [vmem:[#allocation14 + $0x18] sm:$0xff]
    %v1435 = vld [vmem:[#allocation14 + $0x20] sm:$0xff]
    %v1436 = vld [vmem:[#allocation14 + $0x28] sm:$0xff]
    %v1437 = vld [vmem:[#allocation14 + $0x30] sm:$0xff]
    %v1438 = vld [vmem:[#allocation14 + $0x38] sm:$0xff]
    %v1439 = vld [vmem:[#allocation14 + $0x40] sm:$0xff]
    %v1440 = vld [vmem:[#allocation14 + $0x48] sm:$0xff]
    %v1441 = vld [vmem:[#allocation14 + $0x50] sm:$0xff]
    %v1442 = vld [vmem:[#allocation14 + $0x58] sm:$0xff]
    %v1443 = vld [vmem:[#allocation14 + $0x60] sm:$0xff]
    %v1444 = vld [vmem:[#allocation14 + $0x68] sm:$0xff]
    %v1445 = vld [vmem:[#allocation14 + $0x70] sm:$0xff]
    %v1446 = vld [vmem:[#allocation14 + $0x78] sm:$0xff]
    %v1447 = vld [vmem:[#allocation14 + $0x80] sm:$0xff]
    %v1448 = vld [vmem:[#allocation14 + $0x88] sm:$0xff]
    %v1449 = vld [vmem:[#allocation14 + $0x90] sm:$0xff]
    %v1450 = vld [vmem:[#allocation14 + $0x98] sm:$0xff]
    %v1451 = vld [vmem:[#allocation14 + $0xa0] sm:$0xff]
    %v1452 = vld [vmem:[#allocation14 + $0xa8] sm:$0xff]
    %v1453 = vld [vmem:[#allocation14 + $0xb0] sm:$0xff]
    %v1454 = vld [vmem:[#allocation14 + $0xb8] sm:$0xff]
    %v1455 = vld [vmem:[#allocation14 + $0xc0] sm:$0xff]
    %v1456 = vld [vmem:[#allocation14 + $0xc8] sm:$0xff]
    %v1457 = vld [vmem:[#allocation14 + $0xd0] sm:$0xff]
    %v1458 = vld [vmem:[#allocation14 + $0xd8] sm:$0xff]
    %v1459 = vld [vmem:[#allocation14 + $0xe0] sm:$0xff]
    %v1460 = vld [vmem:[#allocation14 + $0xe8] sm:$0xff]
    %v1461 = vld [vmem:[#allocation14 + $0xf0] sm:$0xff]
    %v1462 = vld [vmem:[#allocation14 + $0xf8] sm:$0xff]
    %v1463 = vld [vmem:[#allocation16] sm:$0x3]
    %v1496 = vunpack.c.l.b16 %v1431
    %v1497 = vunpack.c.h.b16 %v1431
    %v1498 = vunpack.c.l.b16 %v1432
    %v1499 = vunpack.c.h.b16 %v1432
    %v1500 = vunpack.c.l.b16 %v1433
    %v1501 = vunpack.c.h.b16 %v1433
    %v1502 = vunpack.c.l.b16 %v1434
    %v1503 = vunpack.c.h.b16 %v1434
    %v1504 = vunpack.c.l.b16 %v1435
    %v1505 = vunpack.c.h.b16 %v1435
    %v1506 = vunpack.c.l.b16 %v1436
    %v1507 = vunpack.c.h.b16 %v1436
    %v1508 = vunpack.c.l.b16 %v1437
    %v1509 = vunpack.c.h.b16 %v1437
    %v1510 = vunpack.c.l.b16 %v1438
    %v1511 = vunpack.c.h.b16 %v1438
    %v1512 = vunpack.c.l.b16 %v1439
    %v1513 = vunpack.c.h.b16 %v1439
    %v1514 = vunpack.c.l.b16 %v1440
    %v1515 = vunpack.c.h.b16 %v1440
    %v1516 = vunpack.c.l.b16 %v1441
    %v1517 = vunpack.c.h.b16 %v1441
    %v1518 = vunpack.c.l.b16 %v1442
    %v1519 = vunpack.c.h.b16 %v1442
    %v1520 = vunpack.c.l.b16 %v1443
    %v1521 = vunpack.c.h.b16 %v1443
    %v1522 = vunpack.c.l.b16 %v1444
    %v1523 = vunpack.c.h.b16 %v1444
    %v1524 = vunpack.c.l.b16 %v1445
    %v1525 = vunpack.c.h.b16 %v1445
    %v1526 = vunpack.c.l.b16 %v1446
    %v1527 = vunpack.c.h.b16 %v1446
    %v1528 = vunpack.c.l.b16 %v1447
    %v1529 = vunpack.c.h.b16 %v1447
    %v1530 = vunpack.c.l.b16 %v1448
    %v1531 = vunpack.c.h.b16 %v1448
    %v1532 = vunpack.c.l.b16 %v1449
    %v1533 = vunpack.c.h.b16 %v1449
    %v1534 = vunpack.c.l.b16 %v1450
    %v1535 = vunpack.c.h.b16 %v1450
    %v1536 = vunpack.c.l.b16 %v1451
    %v1537 = vunpack.c.h.b16 %v1451
    %v1538 = vunpack.c.l.b16 %v1452
    %v1539 = vunpack.c.h.b16 %v1452
    %v1540 = vunpack.c.l.b16 %v1453
    %v1541 = vunpack.c.h.b16 %v1453
    %v1542 = vunpack.c.l.b16 %v1454
    %v1543 = vunpack.c.h.b16 %v1454
    %v1544 = vunpack.c.l.b16 %v1455
    %v1545 = vunpack.c.h.b16 %v1455
    %v1546 = vunpack.c.l.b16 %v1456
    %v1547 = vunpack.c.h.b16 %v1456
    %v1548 = vunpack.c.l.b16 %v1457
    %v1549 = vunpack.c.h.b16 %v1457
    %v1550 = vunpack.c.l.b16 %v1458
    %v1551 = vunpack.c.h.b16 %v1458
    %v1552 = vunpack.c.l.b16 %v1459
    %v1553 = vunpack.c.h.b16 %v1459
    %v1554 = vunpack.c.l.b16 %v1460
    %v1555 = vunpack.c.h.b16 %v1460
    %v1556 = vunpack.c.l.b16 %v1461
    %v1557 = vunpack.c.h.b16 %v1461
    %v1558 = vunpack.c.l.b16 %v1462
    %v1559 = vunpack.c.h.b16 %v1462
    %v1560 = vpack.c.b16 %v1498, %v1496
    %v1561 = vpack.c.b16 %v1499, %v1497
    %v1562 = vpack.c.b16 %v1502, %v1500
    %v1563 = vpack.c.b16 %v1503, %v1501
    %v1564 = vpack.c.b16 %v1506, %v1504
    %v1565 = vpack.c.b16 %v1507, %v1505
    %v1566 = vpack.c.b16 %v1510, %v1508
    %v1567 = vpack.c.b16 %v1511, %v1509
    %v1568 = vpack.c.b16 %v1514, %v1512
    %v1569 = vpack.c.b16 %v1515, %v1513
    %v1570 = vpack.c.b16 %v1518, %v1516
    %v1571 = vpack.c.b16 %v1519, %v1517
    %v1572 = vpack.c.b16 %v1522, %v1520
    %v1573 = vpack.c.b16 %v1523, %v1521
    %v1574 = vpack.c.b16 %v1526, %v1524
    %v1575 = vpack.c.b16 %v1527, %v1525
    %v1576 = vpack.c.b16 %v1530, %v1528
    %v1577 = vpack.c.b16 %v1531, %v1529
    %v1578 = vpack.c.b16 %v1534, %v1532
    %v1579 = vpack.c.b16 %v1535, %v1533
    %v1580 = vpack.c.b16 %v1538, %v1536
    %v1581 = vpack.c.b16 %v1539, %v1537
    %v1582 = vpack.c.b16 %v1542, %v1540
    %v1583 = vpack.c.b16 %v1543, %v1541
    %v1584 = vpack.c.b16 %v1546, %v1544
    %v1585 = vpack.c.b16 %v1547, %v1545
    %v1586 = vpack.c.b16 %v1550, %v1548
    %v1587 = vpack.c.b16 %v1551, %v1549
    %v1588 = vpack.c.b16 %v1554, %v1552
    %v1589 = vpack.c.b16 %v1555, %v1553
    %v1590 = vpack.c.b16 %v1558, %v1556
    %v1591 = vpack.c.b16 %v1559, %v1557
    %v1625 = vlaneseq
    %v1626 = vshrl.u32 %v1625, 7
    %v1627 = vsub.s32 0, %v1626
    %v1628 = vrot.slane %v1463, %v1627
    %v1629 = vlaneseq
    %v1630 = vshrl.u32 %v1629, 7
    %v1631 = vsub.s32 1, %v1630
    %v1632 = vrot.slane %v1463, %v1631
    %1635 = vmatprep.subr.bf16.mxu0 %v1575
    %1636 = vmatpush1.bf16.msra.mxu0 %v1574
    %1637 = vmatprep.subr.bf16.mxu0 %v1573
    %1638 = vmatpush1.bf16.msra.mxu0 %v1572
    %1639 = vmatprep.subr.bf16.mxu0 %v1571
    %1640 = vmatpush1.bf16.msra.mxu0 %v1570
    %1641 = vmatprep.subr.bf16.mxu0 %v1569
    %1642 = vmatpush1.bf16.msra.mxu0 %v1568
    %1643 = vmatprep.subr.bf16.mxu0 %v1567
    %1644 = vmatpush1.bf16.msra.mxu0 %v1566
    %1645 = vmatprep.subr.bf16.mxu0 %v1565
    %1646 = vmatpush1.bf16.msra.mxu0 %v1564
    %1647 = vmatprep.subr.bf16.mxu0 %v1563
    %1648 = vmatpush1.bf16.msra.mxu0 %v1562
    %1649 = vmatprep.subr.bf16.mxu0 %v1561
    %1650 = vmatpush1.bf16.msra.mxu0 %v1560
    %1651 = vmatprep.subr.bf16.mxu0 %v1591
    %1652 = vmatpush2.bf16.msra.mxu0 %v1590
    %1653 = vmatprep.subr.bf16.mxu0 %v1589
    %1654 = vmatpush2.bf16.msra.mxu0 %v1588
    %1655 = vmatprep.subr.bf16.mxu0 %v1587
    %1656 = vmatpush2.bf16.msra.mxu0 %v1586
    %1657 = vmatprep.subr.bf16.mxu0 %v1585
    %1658 = vmatpush2.bf16.msra.mxu0 %v1584
    %1659 = vmatprep.subr.bf16.mxu0 %v1583
    %1660 = vmatpush2.bf16.msra.mxu0 %v1582
    %1661 = vmatprep.subr.bf16.mxu0 %v1581
    %1662 = vmatpush2.bf16.msra.mxu0 %v1580
    %1663 = vmatprep.subr.bf16.mxu0 %v1579
    %1664 = vmatpush2.bf16.msra.mxu0 %v1578
    %1665 = vmatprep.subr.bf16.mxu0 %v1577
    %1666 = vmatpush2.bf16.msra.mxu0 %v1576
    %1667 = vmatprep.mubr.bf16.mxu0 %v1430
    %1668 = vmatmul.mubr.bf16.gmra.mxu0 %v1429
    %v1669 = vpop.f32.mrf.mxu0
    %v1670 = vadd.f32 %v1628, %v1669
    %v1671 = vpop.f32.mrf.mxu0
    %v1672 = vadd.f32 %v1632, %v1671
    %v1673 = vpop.f32.mrf.mxu0
    %v1674 = vpop.f32.mrf.mxu0
    %1675 = vdwg.mxu0
    %v1676 = vmul.f32 %v1180, 4.126576
    %v1677 = vmul.f32 %v1670, -3.887128
    %v1678 = vmul.f32 %v1672, -3.887128
    %v1681 = vcombine.low %v1677, %v1678
    %v1683 = vunpack.c.l.s4 1966171168
    %v1684 = vunpack.c.0.s8 %v1683
    %v1685 = vlaneseq
    %v1686 = vshrl.u32 %v1685, 7
    %v1687 = vsub.s32 %v1684, %v1686
    %v1688 = vrot.slane %v1681, %v1687
    %v1690 = vunpack.c.l.s4 1966171168
    %v1691 = vunpack.c.0.s8 %v1690
    %v1692 = vlaneseq
    %v1693 = vshrl.u32 %v1692, 7
    %v1694 = vsub.s32 %v1691, %v1693
    %v1695 = vrot.slane %v1688, %v1694
    %v1697 = vadd.f32 %v1676, %v1695
    %v1698 = vld [vmem:[%s12] ss:$8 sm:$0x3]
    %v1699 = vmul.f32 %v1698, 0.95857334
    %v1700 = vadd.f32 %v1697, %v1699
    %v1702 = vlaneseq
    %v1703 = vshrl.u32 %v1702, 7
    %v1704 = vsub.s32 0, %v1703
    %v1705 = vrot.slane %v1700, %v1704
    %v1706 = vlaneseq
    %v1707 = vshrl.u32 %v1706, 7
    %v1708 = vsub.s32 1, %v1707
    %v1709 = vrot.slane %v1700, %v1708
    %v1712 = vpack.c.bf16 %v1705, %v1705
    %v1713 = vpack.c.bf16 %v1709, %v1709
    %v1716 = vrot.slane %v1178, 1
    %v1717 = vrot.slane %v1179, 1
    %1720 = vmatprep.subr.bf16.mxu0 %v1337
    %1721 = vmatpush1.bf16.msra.mxu0 %v1336
    %1722 = vmatprep.subr.bf16.mxu0 %v1335
    %1723 = vmatpush1.bf16.msra.mxu0 %v1334
    %1724 = vmatprep.subr.bf16.mxu0 %v1333
    %1725 = vmatpush1.bf16.msra.mxu0 %v1332
    %1726 = vmatprep.subr.bf16.mxu0 %v1331
    %1727 = vmatpush1.bf16.msra.mxu0 %v1330
    %1728 = vmatprep.subr.bf16.mxu0 %v1329
    %1729 = vmatpush1.bf16.msra.mxu0 %v1328
    %1730 = vmatprep.subr.bf16.mxu0 %v1327
    %1731 = vmatpush1.bf16.msra.mxu0 %v1326
    %1732 = vmatprep.subr.bf16.mxu0 %v1325
    %1733 = vmatpush1.bf16.msra.mxu0 %v1324
    %1734 = vmatprep.subr.bf16.mxu0 %v1323
    %1735 = vmatpush1.bf16.msra.mxu0 %v1322
    %1736 = vmatprep.subr.bf16.mxu0 %v1353
    %1737 = vmatpush2.bf16.msra.mxu0 %v1352
    %1738 = vmatprep.subr.bf16.mxu0 %v1351
    %1739 = vmatpush2.bf16.msra.mxu0 %v1350
    %1740 = vmatprep.subr.bf16.mxu0 %v1349
    %1741 = vmatpush2.bf16.msra.mxu0 %v1348
    %1742 = vmatprep.subr.bf16.mxu0 %v1347
    %1743 = vmatpush2.bf16.msra.mxu0 %v1346
    %1744 = vmatprep.subr.bf16.mxu0 %v1345
    %1745 = vmatpush2.bf16.msra.mxu0 %v1344
    %1746 = vmatprep.subr.bf16.mxu0 %v1343
    %1747 = vmatpush2.bf16.msra.mxu0 %v1342
    %1748 = vmatprep.subr.bf16.mxu0 %v1341
    %1749 = vmatpush2.bf16.msra.mxu0 %v1340
    %1750 = vmatprep.subr.bf16.mxu0 %v1339
    %1751 = vmatpush2.bf16.msra.mxu0 %v1338
    %1752 = vmatprep.mubr.bf16.mxu0 %v1713
    %1753 = vmatmul.mubr.bf16.gmra.mxu0 %v1712
    %v1754 = vpop.f32.mrf.mxu0
    %v1755 = vadd.f32 %v1716, %v1754
    %v1756 = vpop.f32.mrf.mxu0
    %v1757 = vadd.f32 %v1717, %v1756
    %v1758 = vpop.f32.mrf.mxu0
    %v1759 = vpop.f32.mrf.mxu0
    %1760 = vdwg.mxu0
    %v1761 = vmax.f32 %v1755, 0.0
    %v1762 = vmax.f32 %v1757, 0.0
    %v1763 = vpack.c.bf16 %v1761, %v1761
    %v1764 = vpack.c.bf16 %v1762, %v1762
    %1765 = vmatprep.subr.bf16.mxu0 %v1575
    %1766 = vmatpush1.bf16.msra.mxu0 %v1574
    %1767 = vmatprep.subr.bf16.mxu0 %v1573
    %1768 = vmatpush1.bf16.msra.mxu0 %v1572
    %1769 = vmatprep.subr.bf16.mxu0 %v1571
    %1770 = vmatpush1.bf16.msra.mxu0 %v1570
    %1771 = vmatprep.subr.bf16.mxu0 %v1569
    %1772 = vmatpush1.bf16.msra.mxu0 %v1568
    %1773 = vmatprep.subr.bf16.mxu0 %v1567
    %1774 = vmatpush1.bf16.msra.mxu0 %v1566
    %1775 = vmatprep.subr.bf16.mxu0 %v1565
    %1776 = vmatpush1.bf16.msra.mxu0 %v1564
    %1777 = vmatprep.subr.bf16.mxu0 %v1563
    %1778 = vmatpush1.bf16.msra.mxu0 %v1562
    %1779 = vmatprep.subr.bf16.mxu0 %v1561
    %1780 = vmatpush1.bf16.msra.mxu0 %v1560
    %1781 = vmatprep.subr.bf16.mxu0 %v1591
    %1782 = vmatpush2.bf16.msra.mxu0 %v1590
    %1783 = vmatprep.subr.bf16.mxu0 %v1589
    %1784 = vmatpush2.bf16.msra.mxu0 %v1588
    %1785 = vmatprep.subr.bf16.mxu0 %v1587
    %1786 = vmatpush2.bf16.msra.mxu0 %v1586
    %1787 = vmatprep.subr.bf16.mxu0 %v1585
    %1788 = vmatpush2.bf16.msra.mxu0 %v1584
    %1789 = vmatprep.subr.bf16.mxu0 %v1583
    %1790 = vmatpush2.bf16.msra.mxu0 %v1582
    %1791 = vmatprep.subr.bf16.mxu0 %v1581
    %1792 = vmatpush2.bf16.msra.mxu0 %v1580
    %1793 = vmatprep.subr.bf16.mxu0 %v1579
    %1794 = vmatpush2.bf16.msra.mxu0 %v1578
    %1795 = vmatprep.subr.bf16.mxu0 %v1577
    %1796 = vmatpush2.bf16.msra.mxu0 %v1576
    %1797 = vmatprep.mubr.bf16.mxu0 %v1764
    %1798 = vmatmul.mubr.bf16.gmra.mxu0 %v1763
    %v1799 = vpop.f32.mrf.mxu0
    %v1800 = vadd.f32 %v1628, %v1799
    %v1801 = vpop.f32.mrf.mxu0
    %v1802 = vadd.f32 %v1632, %v1801
    %v1803 = vpop.f32.mrf.mxu0
    %v1804 = vpop.f32.mrf.mxu0
    %1805 = vdwg.mxu0
    %v1806 = vmul.f32 %v1700, 2.7570913
    %v1807 = vmul.f32 %v1800, -2.425215
    %v1808 = vmul.f32 %v1802, -2.425215
    %v1811 = vcombine.low %v1807, %v1808
    %v1813 = vunpack.c.l.s4 1966171168
    %v1814 = vunpack.c.0.s8 %v1813
    %v1815 = vlaneseq
    %v1816 = vshrl.u32 %v1815, 7
    %v1817 = vsub.s32 %v1814, %v1816
    %v1818 = vrot.slane %v1811, %v1817
    %v1820 = vunpack.c.l.s4 1966171168
    %v1821 = vunpack.c.0.s8 %v1820
    %v1822 = vlaneseq
    %v1823 = vshrl.u32 %v1822, 7
    %v1824 = vsub.s32 %v1821, %v1823
    %v1825 = vrot.slane %v1818, %v1824
    %v1827 = vadd.f32 %v1806, %v1825
    %s1828 = scalar_lea.vmem %s12, 1
    %v1829 = vld [vmem:[%s1828] ss:$8 sm:$0x3]
    %v1830 = vmul.f32 %v1829, 0.84845966
    %v1831 = vadd.f32 %v1827, %v1830
    %v1833 = vlaneseq
    %v1834 = vshrl.u32 %v1833, 7
    %v1835 = vsub.s32 0, %v1834
    %v1836 = vrot.slane %v1831, %v1835
    %v1837 = vlaneseq
    %v1838 = vshrl.u32 %v1837, 7
    %v1839 = vsub.s32 1, %v1838
    %v1840 = vrot.slane %v1831, %v1839
    %v1843 = vpack.c.bf16 %v1836, %v1836
    %v1844 = vpack.c.bf16 %v1840, %v1840
    %v1845 = vrot.slane %v1178, 2
    %v1846 = vrot.slane %v1179, 2
    %1849 = vmatprep.subr.bf16.mxu0 %v1337
    %1850 = vmatpush1.bf16.msra.mxu0 %v1336
    %1851 = vmatprep.subr.bf16.mxu0 %v1335
    %1852 = vmatpush1.bf16.msra.mxu0 %v1334
    %1853 = vmatprep.subr.bf16.mxu0 %v1333
    %1854 = vmatpush1.bf16.msra.mxu0 %v1332
    %1855 = vmatprep.subr.bf16.mxu0 %v1331
    %1856 = vmatpush1.bf16.msra.mxu0 %v1330
    %1857 = vmatprep.subr.bf16.mxu0 %v1329
    %1858 = vmatpush1.bf16.msra.mxu0 %v1328
    %1859 = vmatprep.subr.bf16.mxu0 %v1327
    %1860 = vmatpush1.bf16.msra.mxu0 %v1326
    %1861 = vmatprep.subr.bf16.mxu0 %v1325
    %1862 = vmatpush1.bf16.msra.mxu0 %v1324
    %1863 = vmatprep.subr.bf16.mxu0 %v1323
    %1864 = vmatpush1.bf16.msra.mxu0 %v1322
    %1865 = vmatprep.subr.bf16.mxu0 %v1353
    %1866 = vmatpush2.bf16.msra.mxu0 %v1352
    %1867 = vmatprep.subr.bf16.mxu0 %v1351
    %1868 = vmatpush2.bf16.msra.mxu0 %v1350
    %1869 = vmatprep.subr.bf16.mxu0 %v1349
    %1870 = vmatpush2.bf16.msra.mxu0 %v1348
    %1871 = vmatprep.subr.bf16.mxu0 %v1347
    %1872 = vmatpush2.bf16.msra.mxu0 %v1346
    %1873 = vmatprep.subr.bf16.mxu0 %v1345
    %1874 = vmatpush2.bf16.msra.mxu0 %v1344
    %1875 = vmatprep.subr.bf16.mxu0 %v1343
    %1876 = vmatpush2.bf16.msra.mxu0 %v1342
    %1877 = vmatprep.subr.bf16.mxu0 %v1341
    %1878 = vmatpush2.bf16.msra.mxu0 %v1340
    %1879 = vmatprep.subr.bf16.mxu0 %v1339
    %1880 = vmatpush2.bf16.msra.mxu0 %v1338
    %1881 = vmatprep.mubr.bf16.mxu0 %v1844
    %1882 = vmatmul.mubr.bf16.gmra.mxu0 %v1843
    %v1883 = vpop.f32.mrf.mxu0
    %v1884 = vadd.f32 %v1845, %v1883
    %v1885 = vpop.f32.mrf.mxu0
    %v1886 = vadd.f32 %v1846, %v1885
    %v1887 = vpop.f32.mrf.mxu0
    %v1888 = vpop.f32.mrf.mxu0
    %1889 = vdwg.mxu0
    %v1890 = vmax.f32 %v1884, 0.0
    %v1891 = vmax.f32 %v1886, 0.0
    %v1892 = vpack.c.bf16 %v1890, %v1890
    %v1893 = vpack.c.bf16 %v1891, %v1891
    %1894 = vmatprep.subr.bf16.mxu0 %v1575
    %1895 = vmatpush1.bf16.msra.mxu0 %v1574
    %1896 = vmatprep.subr.bf16.mxu0 %v1573
    %1897 = vmatpush1.bf16.msra.mxu0 %v1572
    %1898 = vmatprep.subr.bf16.mxu0 %v1571
    %1899 = vmatpush1.bf16.msra.mxu0 %v1570
    %1900 = vmatprep.subr.bf16.mxu0 %v1569
    %1901 = vmatpush1.bf16.msra.mxu0 %v1568
    %1902 = vmatprep.subr.bf16.mxu0 %v1567
    %1903 = vmatpush1.bf16.msra.mxu0 %v1566
    %1904 = vmatprep.subr.bf16.mxu0 %v1565
    %1905 = vmatpush1.bf16.msra.mxu0 %v1564
    %1906 = vmatprep.subr.bf16.mxu0 %v1563
    %1907 = vmatpush1.bf16.msra.mxu0 %v1562
    %1908 = vmatprep.subr.bf16.mxu0 %v1561
    %1909 = vmatpush1.bf16.msra.mxu0 %v1560
    %1910 = vmatprep.subr.bf16.mxu0 %v1591
    %1911 = vmatpush2.bf16.msra.mxu0 %v1590
    %1912 = vmatprep.subr.bf16.mxu0 %v1589
    %1913 = vmatpush2.bf16.msra.mxu0 %v1588
    %1914 = vmatprep.subr.bf16.mxu0 %v1587
    %1915 = vmatpush2.bf16.msra.mxu0 %v1586
    %1916 = vmatprep.subr.bf16.mxu0 %v1585
    %1917 = vmatpush2.bf16.msra.mxu0 %v1584
    %1918 = vmatprep.subr.bf16.mxu0 %v1583
    %1919 = vmatpush2.bf16.msra.mxu0 %v1582
    %1920 = vmatprep.subr.bf16.mxu0 %v1581
    %1921 = vmatpush2.bf16.msra.mxu0 %v1580
    %1922 = vmatprep.subr.bf16.mxu0 %v1579
    %1923 = vmatpush2.bf16.msra.mxu0 %v1578
    %1924 = vmatprep.subr.bf16.mxu0 %v1577
    %1925 = vmatpush2.bf16.msra.mxu0 %v1576
    %1926 = vmatprep.mubr.bf16.mxu0 %v1893
    %1927 = vmatmul.mubr.bf16.gmra.mxu0 %v1892
    %v1928 = vpop.f32.mrf.mxu0
    %v1929 = vadd.f32 %v1628, %v1928
    %v1930 = vpop.f32.mrf.mxu0
    %v1931 = vadd.f32 %v1632, %v1930
    %v1932 = vpop.f32.mrf.mxu0
    %v1933 = vpop.f32.mrf.mxu0
    %1934 = vdwg.mxu0
    %v1935 = vmul.f32 %v1831, 1.8450829
    %v1936 = vmul.f32 %v1929, -1.4496876
    %v1937 = vmul.f32 %v1931, -1.4496876
    %v1940 = vcombine.low %v1936, %v1937
    %v1942 = vunpack.c.l.s4 1966171168
    %v1943 = vunpack.c.0.s8 %v1942
    %v1944 = vlaneseq
    %v1945 = vshrl.u32 %v1944, 7
    %v1946 = vsub.s32 %v1943, %v1945
    %v1947 = vrot.slane %v1940, %v1946
    %v1949 = vunpack.c.l.s4 1966171168
    %v1950 = vunpack.c.0.s8 %v1949
    %v1951 = vlaneseq
    %v1952 = vshrl.u32 %v1951, 7
    %v1953 = vsub.s32 %v1950, %v1952
    %v1954 = vrot.slane %v1947, %v1953
    %v1956 = vadd.f32 %v1935, %v1954
    %s1957 = scalar_lea.vmem %s12, 2
    %v1958 = vld [vmem:[%s1957] ss:$8 sm:$0x3]
    %v1959 = vmul.f32 %v1958, 0.55021536
    %v1960 = vadd.f32 %v1956, %v1959
    %v1962 = vlaneseq
    %v1963 = vshrl.u32 %v1962, 7
    %v1964 = vsub.s32 0, %v1963
    %v1965 = vrot.slane %v1960, %v1964
    %v1966 = vlaneseq
    %v1967 = vshrl.u32 %v1966, 7
    %v1968 = vsub.s32 1, %v1967
    %v1969 = vrot.slane %v1960, %v1968
    %v1972 = vpack.c.bf16 %v1965, %v1965
    %v1973 = vpack.c.bf16 %v1969, %v1969
    %v1974 = vrot.slane %v1178, 3
    %v1975 = vrot.slane %v1179, 3
    %1978 = vmatprep.subr.bf16.mxu0 %v1337
    %1979 = vmatpush1.bf16.msra.mxu0 %v1336
    %1980 = vmatprep.subr.bf16.mxu0 %v1335
    %1981 = vmatpush1.bf16.msra.mxu0 %v1334
    %1982 = vmatprep.subr.bf16.mxu0 %v1333
    %1983 = vmatpush1.bf16.msra.mxu0 %v1332
    %1984 = vmatprep.subr.bf16.mxu0 %v1331
    %1985 = vmatpush1.bf16.msra.mxu0 %v1330
    %1986 = vmatprep.subr.bf16.mxu0 %v1329
    %1987 = vmatpush1.bf16.msra.mxu0 %v1328
    %1988 = vmatprep.subr.bf16.mxu0 %v1327
    %1989 = vmatpush1.bf16.msra.mxu0 %v1326
    %1990 = vmatprep.subr.bf16.mxu0 %v1325
    %1991 = vmatpush1.bf16.msra.mxu0 %v1324
    %1992 = vmatprep.subr.bf16.mxu0 %v1323
    %1993 = vmatpush1.bf16.msra.mxu0 %v1322
    %1994 = vmatprep.subr.bf16.mxu0 %v1353
    %1995 = vmatpush2.bf16.msra.mxu0 %v1352
    %1996 = vmatprep.subr.bf16.mxu0 %v1351
    %1997 = vmatpush2.bf16.msra.mxu0 %v1350
    %1998 = vmatprep.subr.bf16.mxu0 %v1349
    %1999 = vmatpush2.bf16.msra.mxu0 %v1348
    %2000 = vmatprep.subr.bf16.mxu0 %v1347
    %2001 = vmatpush2.bf16.msra.mxu0 %v1346
    %2002 = vmatprep.subr.bf16.mxu0 %v1345
    %2003 = vmatpush2.bf16.msra.mxu0 %v1344
    %2004 = vmatprep.subr.bf16.mxu0 %v1343
    %2005 = vmatpush2.bf16.msra.mxu0 %v1342
    %2006 = vmatprep.subr.bf16.mxu0 %v1341
    %2007 = vmatpush2.bf16.msra.mxu0 %v1340
    %2008 = vmatprep.subr.bf16.mxu0 %v1339
    %2009 = vmatpush2.bf16.msra.mxu0 %v1338
    %2010 = vmatprep.mubr.bf16.mxu0 %v1973
    %2011 = vmatmul.mubr.bf16.gmra.mxu0 %v1972
    %v2012 = vpop.f32.mrf.mxu0
    %v2013 = vadd.f32 %v1974, %v2012
    %v2014 = vpop.f32.mrf.mxu0
    %v2015 = vadd.f32 %v1975, %v2014
    %v2016 = vpop.f32.mrf.mxu0
    %v2017 = vpop.f32.mrf.mxu0
    %2018 = vdwg.mxu0
    %v2019 = vmax.f32 %v2013, 0.0
    %v2020 = vmax.f32 %v2015, 0.0
    %v2021 = vpack.c.bf16 %v2019, %v2019
    %v2022 = vpack.c.bf16 %v2020, %v2020
    %2023 = vmatprep.subr.bf16.mxu0 %v1575
    %2024 = vmatpush1.bf16.msra.mxu0 %v1574
    %2025 = vmatprep.subr.bf16.mxu0 %v1573
    %2026 = vmatpush1.bf16.msra.mxu0 %v1572
    %2027 = vmatprep.subr.bf16.mxu0 %v1571
    %2028 = vmatpush1.bf16.msra.mxu0 %v1570
    %2029 = vmatprep.subr.bf16.mxu0 %v1569
    %2030 = vmatpush1.bf16.msra.mxu0 %v1568
    %2031 = vmatprep.subr.bf16.mxu0 %v1567
    %2032 = vmatpush1.bf16.msra.mxu0 %v1566
    %2033 = vmatprep.subr.bf16.mxu0 %v1565
    %2034 = vmatpush1.bf16.msra.mxu0 %v1564
    %2035 = vmatprep.subr.bf16.mxu0 %v1563
    %2036 = vmatpush1.bf16.msra.mxu0 %v1562
    %2037 = vmatprep.subr.bf16.mxu0 %v1561
    %2038 = vmatpush1.bf16.msra.mxu0 %v1560
    %2039 = vmatprep.subr.bf16.mxu0 %v1591
    %2040 = vmatpush2.bf16.msra.mxu0 %v1590
    %2041 = vmatprep.subr.bf16.mxu0 %v1589
    %2042 = vmatpush2.bf16.msra.mxu0 %v1588
    %2043 = vmatprep.subr.bf16.mxu0 %v1587
    %2044 = vmatpush2.bf16.msra.mxu0 %v1586
    %2045 = vmatprep.subr.bf16.mxu0 %v1585
    %2046 = vmatpush2.bf16.msra.mxu0 %v1584
    %2047 = vmatprep.subr.bf16.mxu0 %v1583
    %2048 = vmatpush2.bf16.msra.mxu0 %v1582
    %2049 = vmatprep.subr.bf16.mxu0 %v1581
    %2050 = vmatpush2.bf16.msra.mxu0 %v1580
    %2051 = vmatprep.subr.bf16.mxu0 %v1579
    %2052 = vmatpush2.bf16.msra.mxu0 %v1578
    %2053 = vmatprep.subr.bf16.mxu0 %v1577
    %2054 = vmatpush2.bf16.msra.mxu0 %v1576
    %2055 = vmatprep.mubr.bf16.mxu0 %v2022
    %2056 = vmatmul.mubr.bf16.gmra.mxu0 %v2021
    %v2057 = vpop.f32.mrf.mxu0
    %v2058 = vadd.f32 %v1628, %v2057
    %v2059 = vpop.f32.mrf.mxu0
    %v2060 = vadd.f32 %v1632, %v2059
    %v2061 = vpop.f32.mrf.mxu0
    %v2062 = vpop.f32.mrf.mxu0
    %2063 = vdwg.mxu0
    %v2064 = vmul.f32 %v1960, 1.2367402
    %v2065 = vmul.f32 %v2058, -0.72753453
    %v2066 = vmul.f32 %v2060, -0.72753453
    %v2069 = vcombine.low %v2065, %v2066
    %v2071 = vunpack.c.l.s4 1966171168
    %v2072 = vunpack.c.0.s8 %v2071
    %v2073 = vlaneseq
    %v2074 = vshrl.u32 %v2073, 7
    %v2075 = vsub.s32 %v2072, %v2074
    %v2076 = vrot.slane %v2069, %v2075
    %v2078 = vunpack.c.l.s4 1966171168
    %v2079 = vunpack.c.0.s8 %v2078
    %v2080 = vlaneseq
    %v2081 = vshrl.u32 %v2080, 7
    %v2082 = vsub.s32 %v2079, %v2081
    %v2083 = vrot.slane %v2076, %v2082
    %v2085 = vadd.f32 %v2064, %v2083
    %s2086 = scalar_lea.vmem %s12, 3
    %v2087 = vld [vmem:[%s2086] ss:$8 sm:$0x3]
    %v2088 = vmul.f32 %v2087, 0.014826215
    %v2089 = vadd.f32 %v2085, %v2088
    %v2091 = vlaneseq
    %v2092 = vshrl.u32 %v2091, 7
    %v2093 = vsub.s32 0, %v2092
    %v2094 = vrot.slane %v2089, %v2093
    %v2095 = vlaneseq
    %v2096 = vshrl.u32 %v2095, 7
    %v2097 = vsub.s32 1, %v2096
    %v2098 = vrot.slane %v2089, %v2097
    %v2101 = vpack.c.bf16 %v2094, %v2094
    %v2102 = vpack.c.bf16 %v2098, %v2098
    %v2103 = vrot.slane %v1178, 4
    %v2104 = vrot.slane %v1179, 4
    %2107 = vmatprep.subr.bf16.mxu0 %v1337
    %2108 = vmatpush1.bf16.msra.mxu0 %v1336
    %2109 = vmatprep.subr.bf16.mxu0 %v1335
    %2110 = vmatpush1.bf16.msra.mxu0 %v1334
    %2111 = vmatprep.subr.bf16.mxu0 %v1333
    %2112 = vmatpush1.bf16.msra.mxu0 %v1332
    %2113 = vmatprep.subr.bf16.mxu0 %v1331
    %2114 = vmatpush1.bf16.msra.mxu0 %v1330
    %2115 = vmatprep.subr.bf16.mxu0 %v1329
    %2116 = vmatpush1.bf16.msra.mxu0 %v1328
    %2117 = vmatprep.subr.bf16.mxu0 %v1327
    %2118 = vmatpush1.bf16.msra.mxu0 %v1326
    %2119 = vmatprep.subr.bf16.mxu0 %v1325
    %2120 = vmatpush1.bf16.msra.mxu0 %v1324
    %2121 = vmatprep.subr.bf16.mxu0 %v1323
    %2122 = vmatpush1.bf16.msra.mxu0 %v1322
    %2123 = vmatprep.subr.bf16.mxu0 %v1353
    %2124 = vmatpush2.bf16.msra.mxu0 %v1352
    %2125 = vmatprep.subr.bf16.mxu0 %v1351
    %2126 = vmatpush2.bf16.msra.mxu0 %v1350
    %2127 = vmatprep.subr.bf16.mxu0 %v1349
    %2128 = vmatpush2.bf16.msra.mxu0 %v1348
    %2129 = vmatprep.subr.bf16.mxu0 %v1347
    %2130 = vmatpush2.bf16.msra.mxu0 %v1346
    %2131 = vmatprep.subr.bf16.mxu0 %v1345
    %2132 = vmatpush2.bf16.msra.mxu0 %v1344
    %2133 = vmatprep.subr.bf16.mxu0 %v1343
    %2134 = vmatpush2.bf16.msra.mxu0 %v1342
    %2135 = vmatprep.subr.bf16.mxu0 %v1341
    %2136 = vmatpush2.bf16.msra.mxu0 %v1340
    %2137 = vmatprep.subr.bf16.mxu0 %v1339
    %2138 = vmatpush2.bf16.msra.mxu0 %v1338
    %2139 = vmatprep.mubr.bf16.mxu0 %v2102
    %2140 = vmatmul.mubr.bf16.gmra.mxu0 %v2101
    %v2141 = vpop.f32.mrf.mxu0
    %v2142 = vadd.f32 %v2103, %v2141
    %v2143 = vpop.f32.mrf.mxu0
    %v2144 = vadd.f32 %v2104, %v2143
    %v2145 = vpop.f32.mrf.mxu0
    %v2146 = vpop.f32.mrf.mxu0
    %2147 = vdwg.mxu0
    %v2148 = vmax.f32 %v2142, 0.0
    %v2149 = vmax.f32 %v2144, 0.0
    %v2150 = vpack.c.bf16 %v2148, %v2148
    %v2151 = vpack.c.bf16 %v2149, %v2149
    %2152 = vmatprep.subr.bf16.mxu0 %v1575
    %2153 = vmatpush1.bf16.msra.mxu0 %v1574
    %2154 = vmatprep.subr.bf16.mxu0 %v1573
    %2155 = vmatpush1.bf16.msra.mxu0 %v1572
    %2156 = vmatprep.subr.bf16.mxu0 %v1571
    %2157 = vmatpush1.bf16.msra.mxu0 %v1570
    %2158 = vmatprep.subr.bf16.mxu0 %v1569
    %2159 = vmatpush1.bf16.msra.mxu0 %v1568
    %2160 = vmatprep.subr.bf16.mxu0 %v1567
    %2161 = vmatpush1.bf16.msra.mxu0 %v1566
    %2162 = vmatprep.subr.bf16.mxu0 %v1565
    %2163 = vmatpush1.bf16.msra.mxu0 %v1564
    %2164 = vmatprep.subr.bf16.mxu0 %v1563
    %2165 = vmatpush1.bf16.msra.mxu0 %v1562
    %2166 = vmatprep.subr.bf16.mxu0 %v1561
    %2167 = vmatpush1.bf16.msra.mxu0 %v1560
    %2168 = vmatprep.subr.bf16.mxu0 %v1591
    %2169 = vmatpush2.bf16.msra.mxu0 %v1590
    %2170 = vmatprep.subr.bf16.mxu0 %v1589
    %2171 = vmatpush2.bf16.msra.mxu0 %v1588
    %2172 = vmatprep.subr.bf16.mxu0 %v1587
    %2173 = vmatpush2.bf16.msra.mxu0 %v1586
    %2174 = vmatprep.subr.bf16.mxu0 %v1585
    %2175 = vmatpush2.bf16.msra.mxu0 %v1584
    %2176 = vmatprep.subr.bf16.mxu0 %v1583
    %2177 = vmatpush2.bf16.msra.mxu0 %v1582
    %2178 = vmatprep.subr.bf16.mxu0 %v1581
    %2179 = vmatpush2.bf16.msra.mxu0 %v1580
    %2180 = vmatprep.subr.bf16.mxu0 %v1579
    %2181 = vmatpush2.bf16.msra.mxu0 %v1578
    %2182 = vmatprep.subr.bf16.mxu0 %v1577
    %2183 = vmatpush2.bf16.msra.mxu0 %v1576
    %2184 = vmatprep.mubr.bf16.mxu0 %v2151
    %2185 = vmatmul.mubr.bf16.gmra.mxu0 %v2150
    %v2186 = vpop.f32.mrf.mxu0
    %v2187 = vadd.f32 %v1628, %v2186
    %v2188 = vpop.f32.mrf.mxu0
    %v2189 = vadd.f32 %v1632, %v2188
    %v2190 = vpop.f32.mrf.mxu0
    %v2191 = vpop.f32.mrf.mxu0
    %2192 = vdwg.mxu0
    %v2193 = vmul.f32 %v2089, 1.00011
    %v2194 = vmul.f32 %v2187, -0.014830924
    %v2195 = vmul.f32 %v2189, -0.014830924
    %v2198 = vcombine.low %v2194, %v2195
    %v2200 = vunpack.c.l.s4 1966171168
    %v2201 = vunpack.c.0.s8 %v2200
    %v2202 = vlaneseq
    %v2203 = vshrl.u32 %v2202, 7
    %v2204 = vsub.s32 %v2201, %v2203
    %v2205 = vrot.slane %v2198, %v2204
    %v2207 = vunpack.c.l.s4 1966171168
    %v2208 = vunpack.c.0.s8 %v2207
    %v2209 = vlaneseq
    %v2210 = vshrl.u32 %v2209, 7
    %v2211 = vsub.s32 %v2208, %v2210
    %v2212 = vrot.slane %v2205, %v2211
    %v2214 = vadd.f32 %v2193, %v2212
    %s2215 = scalar_lea.vmem %s12, 4
    %v2216 = vld [vmem:[%s2215] ss:$8 sm:$0x3]
    %v2217 = vmul.f32 %v2216, 0.0
    %v2218 = vadd.f32 %v2214, %v2217
    %v2219 = vlaneseq
    %vm2220 = vcmp.ge.s32.totalorder %v2219, 0
    %vm2221 = vcmp.lt.s32.totalorder %v2219, 256
    %vm2222 = vmand %vm2220, %vm2221
    %2223 = vst.msk [vmem:[#allocation19] sm:$0x3] %vm2222, %v2218
    // Predicated region
    $region94: #{_sample_impl.1} parent=1 // pred_check
      _
    $region95: #{_sample_impl.1} parent=1 // pred_check_branch
      %2225 = sbr.rel (0) target = $region97
    $region96: #{_sample_impl.1} parent=1 // pred_region
      %s2227 = ssub.s32 32, 32
      %2228 = vsyncadd [#allocation4], %s2227
      %s2230 = sshll.u32 [#allocation19], 4
      %s2231 = int_to_ptr.vmem [resolvable:$true] %s2230
      %2233 = dma.vmem_to_hbm [thread:$0]  %s2231, 32, %s13, [#allocation4]
    $region97: #{_sample_impl.1} parent=1 // pred_fallthru
      _
    // Predicated region
    $region98: #{_sample_impl.1} parent=1 // pred_check
      _
    $region99: #{_sample_impl.1} parent=1 // pred_check_branch
      %2235 = sbr.rel (0) target = $region101
    $region100: #{_sample_impl.1} parent=1 // pred_region
      %2236 = dma.done [#allocation4], 32
    $region101: #{_sample_impl.1} parent=1 // pred_fallthru
      _
    %2237 = vsyncpa [#allocation3], 1
    %2238 = vsyncpa [#allocation6], 1
    %2239 = vsyncpa [#allocation9], 1
    %2240 = vsyncpa [#allocation12], 1
    %2241 = vsyncpa [#allocation15], 1
    %2242 = vsyncpa [#allocation18], 1
    %2243 = vsyncpa [#allocation4], 1

</llo_original>
